<compile_context>
chip_gen: v7x
topology: tpu7x:2x2x1
jax: 0.10.0
libtpu: 0.0.40
codegen_flags: <defaults>
</compile_context>

<pallas_src>
import functools

import jax
import jax.numpy as jnp
from jax.experimental import pallas as pl
from jax.experimental.pallas import tpu as pltpu


_COMPILER_PARAMS = pltpu.CompilerParams(
    dimension_semantics=("parallel",),       # batch tiles are independent
    vmem_limit_bytes=32 * 1024 * 1024,       # explicit budget, fits all gens
)


# --------------------------------------------------------------------------
# In-kernel helpers
# --------------------------------------------------------------------------
def _conv_rows(x, m_ref, conv_dtype):
    """3x3 'same' conv on lane-dense (NB, H, W*C) activations.

    The three kw taps are pre-folded into block-banded (W*C, W*C) matrices
    (one per kh), so the conv is 3 MXU matmuls plus a shift-add along H.
    Zero padding is implicit: out-of-range taps simply drop out.
    """
    nb, h, wc = x.shape
    x2d = x.reshape(nb * h, wc).astype(conv_dtype)   # free reshape (H % 8 == 0)
    z = []
    for kh in range(3):
        zk = jnp.dot(x2d, m_ref[kh], preferred_element_type=jnp.float32)
        z.append(zk.reshape(nb, h, wc))
    zero_row = jnp.zeros((nb, 1, wc), jnp.float32)
    # out[:, ho] = z1[:, ho] + z0[:, ho-1] + z2[:, ho+1]   (zeros off the edge)
    y = z[1]
    y = y + jnp.concatenate([zero_row, z[0][:, :h - 1, :]], axis=1)
    y = y + jnp.concatenate([z[2][:, 1:, :], zero_row], axis=1)
    return y


def _write_partial_stats(y, stats_ref):
    """Per-tile partial sums for training-mode BN, shape (1, 2, W*C)."""
    nb, h, wc = y.shape
    y2d = y.reshape(nb * h, wc)
    stats_ref[:, 0:1, :] = jnp.sum(y2d, axis=0, keepdims=True).reshape(1, 1, wc)
    stats_ref[:, 1:2, :] = jnp.sum(y2d * y2d, axis=0,
                                   keepdims=True).reshape(1, 1, wc)


# --------------------------------------------------------------------------
# Kernels (one per pass)
# --------------------------------------------------------------------------
def _conv_stats_kernel(conv_dtype, x_ref, m_ref, y_ref, stats_ref):
    y = _conv_rows(x_ref[...], m_ref, conv_dtype)
    y_ref[...] = y
    _write_partial_stats(y, stats_ref)


def _bn_relu_conv_stats_kernel(conv_dtype, y1_ref, scale_ref, shift_ref,
                               m_ref, y2_ref, stats_ref):
    # BN folded into a per-lane scale/shift (computed between passes), then ReLU.
    act = jnp.maximum(y1_ref[...] * scale_ref[...] + shift_ref[...], 0.0)
    y2 = _conv_rows(act, m_ref, conv_dtype)
    y2_ref[...] = y2
    _write_partial_stats(y2, stats_ref)


def _bn_add_relu_kernel(y2_ref, scale_ref, shift_ref, x_ref, o_ref):
    # Residual re-read here (short live range), BN folded, final ReLU.
    o_ref[...] = jnp.maximum(
        y2_ref[...] * scale_ref[...] + shift_ref[...] + x_ref[...], 0.0)


# --------------------------------------------------------------------------
# pallas_call wrappers (gridded over batch tiles)
# --------------------------------------------------------------------------
def _phase1(x_row, m1, batch_tile, conv_dtype):
    n, h, wc = x_row.shape
    t = n // batch_tile
    act_spec = pl.BlockSpec((batch_tile, h, wc), lambda i: (i, 0, 0))
    return pl.pallas_call(
        functools.partial(_conv_stats_kernel, conv_dtype),
        grid=(t,),
        in_specs=[act_spec,
                  pl.BlockSpec((3, wc, wc), lambda i: (0, 0, 0))],
        out_specs=[act_spec,
                   pl.BlockSpec((1, 2, wc), lambda i: (i, 0, 0))],
        out_shape=[jax.ShapeDtypeStruct((n, h, wc), jnp.float32),
                   jax.ShapeDtypeStruct((t, 2, wc), jnp.float32)],
        compiler_params=_COMPILER_PARAMS,
        cost_estimate=pl.CostEstimate(
            flops=2 * 3 * n * h * wc * wc,
            transcendentals=0,
            bytes_accessed=4 * (2 * n * h * wc + 3 * wc * wc + 2 * t * wc)),
    )(x_row, m1)


def _phase2(y1, scale1, shift1, m2, batch_tile, conv_dtype):
    n, h, wc = y1.shape
    t = n // batch_tile
    act_spec = pl.BlockSpec((batch_tile, h, wc), lambda i: (i, 0, 0))
    vec_spec = pl.BlockSpec((1, wc), lambda i: (0, 0))
    return pl.pallas_call(
        functools.partial(_bn_relu_conv_stats_kernel, conv_dtype),
        grid=(t,),
        in_specs=[act_spec, vec_spec, vec_spec,
                  pl.BlockSpec((3, wc, wc), lambda i: (0, 0, 0))],
        out_specs=[act_spec,
                   pl.BlockSpec((1, 2, wc), lambda i: (i, 0, 0))],
        out_shape=[jax.ShapeDtypeStruct((n, h, wc), jnp.float32),
                   jax.ShapeDtypeStruct((t, 2, wc), jnp.float32)],
        compiler_params=_COMPILER_PARAMS,
        cost_estimate=pl.CostEstimate(
            flops=2 * 3 * n * h * wc * wc + 4 * n * h * wc,
            transcendentals=0,
            bytes_accessed=4 * (2 * n * h * wc + 3 * wc * wc
                                + 2 * t * wc + 2 * wc)),
    )(y1, scale1, shift1, m2)


def _phase3(y2, scale2, shift2, x_row, batch_tile):
    n, h, wc = y2.shape
    t = n // batch_tile
    act_spec = pl.BlockSpec((batch_tile, h, wc), lambda i: (i, 0, 0))
    vec_spec = pl.BlockSpec((1, wc), lambda i: (0, 0))
    return pl.pallas_call(
        _bn_add_relu_kernel,
        grid=(t,),
        in_specs=[act_spec, vec_spec, vec_spec, act_spec],
        out_specs=act_spec,
        out_shape=jax.ShapeDtypeStruct((n, h, wc), jnp.float32),
        compiler_params=_COMPILER_PARAMS,
        cost_estimate=pl.CostEstimate(
            flops=4 * n * h * wc,
            transcendentals=0,
            bytes_accessed=4 * (4 * n * h * wc + 2 * wc)),
    )(y2, scale2, shift2, x_row)


# --------------------------------------------------------------------------
# Wrapper-side preprocessing (tiny XLA ops, done once per call)
# --------------------------------------------------------------------------
def _fold_conv_weight(w_oihw, w_spatial):
    """Fold the 3 kw taps of an OIHW 3x3 conv weight into block-banded
    (W*C, W*C) matrices acting on a lane-dense (.., W*C) activation row,
    one matrix per kh."""
    c = w_oihw.shape[0]
    w_hwio = jnp.transpose(w_oihw, (2, 3, 1, 0)).astype(jnp.float32)  # (3,3,Ci,Co)
    mats = []
    for kh in range(3):
        m = jnp.zeros((w_spatial * c, w_spatial * c), jnp.float32)
        for kw in range(3):
            # band[wi, wo] = 1  iff  wi == wo + kw - 1
            band = jnp.eye(w_spatial, w_spatial, k=1 - kw, dtype=jnp.float32)
            m = m + jnp.kron(band, w_hwio[kh, kw])
        mats.append(m)
    return jnp.stack(mats, axis=0)   # (3, W*C, W*C)


def _bn_scale_shift(stats, gamma, beta, count, w_spatial, c, eps):
    """Finalize training-mode BN from per-tile partial sums and fold it into
    per-lane scale/shift vectors in the (1, W*C) layout."""
    s = jnp.sum(stats, axis=0).reshape(2, w_spatial, c).sum(axis=1)   # (2, C)
    mean = s[0] / count
    var = jnp.maximum(s[1] / count - mean * mean, 0.0)                # biased
    scale_c = gamma.astype(jnp.float32) * jax.lax.rsqrt(var + eps)
    shift_c = beta.astype(jnp.float32) - mean * scale_c
    scale = jnp.tile(scale_c, w_spatial).reshape(1, w_spatial * c)
    shift = jnp.tile(shift_c, w_spatial).reshape(1, w_spatial * c)
    return scale, shift


def block_forward(x_nchw, w1_oihw, g1, b1, w2_oihw, g2, b2, eps=1e-5,
                  batch_tile=1, conv_dtype=jnp.float32):
    """Pallas forward pass. Takes/returns PyTorch-layout (NCHW) tensors."""
    n, c, hh, ww = x_nchw.shape
    assert n % batch_tile == 0, (n, batch_tile)
    wc = ww * c
    count = n * hh * ww

    # NCHW -> lane-dense row layout (N, H, W*C); channel fastest within a lane group.
    x_row = jnp.transpose(x_nchw, (0, 2, 3, 1)).reshape(n, hh, wc)
    x_row = x_row.astype(jnp.float32)

    m1 = _fold_conv_weight(w1_oihw, ww).astype(conv_dtype)
    m2 = _fold_conv_weight(w2_oihw, ww).astype(conv_dtype)

    # Pass 1: conv1 + partial BN1 stats
    y1, st1 = _phase1(x_row, m1, batch_tile, conv_dtype)
    scale1, shift1 = _bn_scale_shift(st1, g1, b1, count, ww, c, eps)

    # Pass 2: bn1 + relu -> conv2 + partial BN2 stats
    y2, st2 = _phase2(y1, scale1, shift1, m2, batch_tile, conv_dtype)
    scale2, shift2 = _bn_scale_shift(st2, g2, b2, count, ww, c, eps)

    # Pass 3: bn2 + residual add + relu
    out_row = _phase3(y2, scale2, shift2, x_row, batch_tile)
    return jnp.transpose(out_row.reshape(n, hh, ww, c), (0, 3, 1, 2))


# --------------------------------------------------------------------------
# Plain-JAX reference (same semantics as the PyTorch module in train mode)
# --------------------------------------------------------------------------
def block_reference(x_nchw, w1, g1, b1, w2, g2, b2, eps=1e-5):
    def conv(x, w):
        return jax.lax.conv_general_dilated(
            x, w, window_strides=(1, 1), padding="SAME",
            dimension_numbers=("NCHW", "OIHW", "NCHW"))

    def bn(y, g, b):
        mean = jnp.mean(y, axis=(0, 2, 3), keepdims=True)
        var = jnp.mean(jnp.square(y - mean), axis=(0, 2, 3), keepdims=True)
        yhat = (y - mean) * jax.lax.rsqrt(var + eps)
        return yhat * g.reshape(1, -1, 1, 1) + b.reshape(1, -1, 1, 1)

    y = jax.nn.relu(bn(conv(x_nchw, w1), g1, b1))
    y = bn(conv(y, w2), g2, b2)
    return jax.nn.relu(y + x_nchw)


if __name__ == "__main__":
    # Small shapes consistent with the module: (N, C, H, W) = (2, 4, 16, 16)
    N, C, H, W = 2, 4, 16, 16

    key = jax.random.PRNGKey(0)
    kx, kw1, kw2 = jax.random.split(key, 3)

    x = jax.random.normal(kx, (N, C, H, W), dtype=jnp.float32)

    # Deterministic parameter init (PyTorch shapes): Conv2d weight (C, C, 3, 3),
    # BatchNorm2d gamma=1, beta=0 (PyTorch defaults).
    fan_in = C * 3 * 3
    bound = 1.0 / (fan_in ** 0.5)
    w1 = jax.random.uniform(kw1, (C, C, 3, 3), jnp.float32, -bound, bound)
    w2 = jax.random.uniform(kw2, (C, C, 3, 3), jnp.float32, -bound, bound)
    g1 = jnp.ones((C,), jnp.float32)
    b1 = jnp.zeros((C,), jnp.float32)
    g2 = jnp.ones((C,), jnp.float32)
    b2 = jnp.zeros((C,), jnp.float32)

    fwd = jax.jit(block_forward)
    out = jax.block_until_ready(fwd(x, w1, g1, b1, w2, g2, b2))
    ref = jax.block_until_ready(block_reference(x, w1, g1, b1, w2, g2, b2))

    assert out.shape == x.shape, (out.shape, x.shape)
    max_err = float(jnp.max(jnp.abs(out - ref)))
    assert max_err < 2e-4, max_err
    print("KERNEL_OK")
</pallas_src>

<mosaic_0001>
module attributes {stable_mosaic.version = 11 : i64} {
  func.func @_conv_stats_kernel(%arg0: i32, %arg1: memref<1x16x64xf32, #tpu.memory_space<vmem>>, %arg2: memref<3x64x64xf32, #tpu.memory_space<vmem>>, %arg3: memref<1x16x64xf32, #tpu.memory_space<vmem>>, %arg4: memref<1x2x64xf32, #tpu.memory_space<vmem>>) attributes {dimension_semantics = [#tpu.dimension_semantics<parallel>], iteration_bounds = array<i64: 2>, scalar_prefetch = 0 : i64, scratch_operands = 0 : i64, tpu.core_type = #tpu.core_type<tc>, window_params = [{transform_indices = @transform_0, window_bounds = array<i64: 1, 16, 64>}, {pipeline_mode = #tpu.pipeline_mode<synchronous>, transform_indices = @transform_1, window_bounds = array<i64: 3, 64, 64>}, {transform_indices = @transform_2, window_bounds = array<i64: 1, 16, 64>}, {transform_indices = @transform_3, window_bounds = array<i64: 1, 2, 64>}]} {
    %c0 = arith.constant 0 : index
    %c0_0 = arith.constant 0 : index
    %c0_1 = arith.constant 0 : index
    %0 = vector.load %arg1[%c0, %c0_0, %c0_1] : memref<1x16x64xf32, #tpu.memory_space<vmem>>, vector<1x16x64xf32>
    %1 = vector.shape_cast %0 : vector<1x16x64xf32> to vector<16x64xf32>
    %c0_2 = arith.constant 0 : index
    %c0_3 = arith.constant 0 : index
    %c0_4 = arith.constant 0 : index
    %2 = vector.load %arg2[%c0_2, %c0_3, %c0_4] : memref<3x64x64xf32, #tpu.memory_space<vmem>>, vector<1x64x64xf32>
    %3 = vector.shape_cast %2 : vector<1x64x64xf32> to vector<64x64xf32>
    %cst = arith.constant dense<0.000000e+00> : vector<16x64xf32>
    %4 = tpu.matmul %1, %3, %cst {dimension_numbers = #tpu.dot_dimension_numbers<[1], [0], [0], [1], [0, 0, 1, 1], [], []>} : vector<16x64xf32>, vector<64x64xf32>, vector<16x64xf32> -> vector<16x64xf32>
    %5 = vector.shape_cast %4 : vector<16x64xf32> to vector<1x16x64xf32>
    %c1 = arith.constant 1 : index
    %c0_5 = arith.constant 0 : index
    %c0_6 = arith.constant 0 : index
    %6 = vector.load %arg2[%c1, %c0_5, %c0_6] : memref<3x64x64xf32, #tpu.memory_space<vmem>>, vector<1x64x64xf32>
    %7 = vector.shape_cast %6 : vector<1x64x64xf32> to vector<64x64xf32>
    %cst_7 = arith.constant dense<0.000000e+00> : vector<16x64xf32>
    %8 = tpu.matmul %1, %7, %cst_7 {dimension_numbers = #tpu.dot_dimension_numbers<[1], [0], [0], [1], [0, 0, 1, 1], [], []>} : vector<16x64xf32>, vector<64x64xf32>, vector<16x64xf32> -> vector<16x64xf32>
    %9 = vector.shape_cast %8 : vector<16x64xf32> to vector<1x16x64xf32>
    %c2 = arith.constant 2 : index
    %c0_8 = arith.constant 0 : index
    %c0_9 = arith.constant 0 : index
    %10 = vector.load %arg2[%c2, %c0_8, %c0_9] : memref<3x64x64xf32, #tpu.memory_space<vmem>>, vector<1x64x64xf32>
    %11 = vector.shape_cast %10 : vector<1x64x64xf32> to vector<64x64xf32>
    %cst_10 = arith.constant dense<0.000000e+00> : vector<16x64xf32>
    %12 = tpu.matmul %1, %11, %cst_10 {dimension_numbers = #tpu.dot_dimension_numbers<[1], [0], [0], [1], [0, 0, 1, 1], [], []>} : vector<16x64xf32>, vector<64x64xf32>, vector<16x64xf32> -> vector<16x64xf32>
    %13 = vector.shape_cast %12 : vector<16x64xf32> to vector<1x16x64xf32>
    %cst_11 = arith.constant 0.000000e+00 : f32
    %14 = vector.broadcast %cst_11 : f32 to vector<1x1x64xf32>
    %15 = vector.extract_strided_slice %5 {offsets = [0, 0, 0], sizes = [1, 15, 64], strides = [1, 1, 1]} : vector<1x16x64xf32> to vector<1x15x64xf32>
    %16 = tpu.concatenate %14, %15 in 1 : vector<1x1x64xf32>, vector<1x15x64xf32> -> vector<1x16x64xf32>
    %17 = arith.addf %9, %16 : vector<1x16x64xf32>
    %18 = vector.extract_strided_slice %13 {offsets = [0, 1, 0], sizes = [1, 15, 64], strides = [1, 1, 1]} : vector<1x16x64xf32> to vector<1x15x64xf32>
    %19 = tpu.concatenate %18, %14 in 1 : vector<1x15x64xf32>, vector<1x1x64xf32> -> vector<1x16x64xf32>
    %20 = arith.addf %17, %19 : vector<1x16x64xf32>
    %c0_12 = arith.constant 0 : index
    %c0_13 = arith.constant 0 : index
    %c0_14 = arith.constant 0 : index
    %21 = vector.load %arg3[%c0_12, %c0_13, %c0_14] : memref<1x16x64xf32, #tpu.memory_space<vmem>>, vector<1x16x64xf32>
    tpu.vector_store %arg3[%c0_12, %c0_13, %c0_14], %20 {strides = array<i32>} : memref<1x16x64xf32, #tpu.memory_space<vmem>>, vector<1x16x64xf32>,
    %22 = vector.shape_cast %20 : vector<1x16x64xf32> to vector<16x64xf32>
    %cst_15 = arith.constant dense<0.000000e+00> : vector<64xf32>
    %23 = vector.multi_reduction <add>, %22, %cst_15 [0] : vector<16x64xf32> to vector<64xf32>
    %24 = vector.shape_cast %23 : vector<64xf32> to vector<1x64xf32>
    %25 = vector.shape_cast %24 : vector<1x64xf32> to vector<1x1x64xf32>
    %c0_16 = arith.constant 0 : index
    %c0_17 = arith.constant 0 : index
    %c0_18 = arith.constant 0 : index
    %26 = vector.load %arg4[%c0_16, %c0_17, %c0_18] : memref<1x2x64xf32, #tpu.memory_space<vmem>>, vector<1x1x64xf32>
    tpu.vector_store %arg4[%c0_16, %c0_17, %c0_18], %25 {strides = array<i32>} : memref<1x2x64xf32, #tpu.memory_space<vmem>>, vector<1x1x64xf32>,
    %27 = arith.mulf %22, %22 : vector<16x64xf32>
    %cst_19 = arith.constant dense<0.000000e+00> : vector<64xf32>
    %28 = vector.multi_reduction <add>, %27, %cst_19 [0] : vector<16x64xf32> to vector<64xf32>
    %29 = vector.shape_cast %28 : vector<64xf32> to vector<1x64xf32>
    %30 = vector.shape_cast %29 : vector<1x64xf32> to vector<1x1x64xf32>
    %c0_20 = arith.constant 0 : index
    %c1_21 = arith.constant 1 : index
    %c0_22 = arith.constant 0 : index
    %31 = vector.load %arg4[%c0_20, %c1_21, %c0_22] : memref<1x2x64xf32, #tpu.memory_space<vmem>>, vector<1x1x64xf32>
    tpu.vector_store %arg4[%c0_20, %c1_21, %c0_22], %30 {strides = array<i32>} : memref<1x2x64xf32, #tpu.memory_space<vmem>>, vector<1x1x64xf32>,
    return
  }
  func.func @transform_0(%arg0: i32) -> (i32, i32, i32) {
    %c0_i32 = arith.constant 0 : i32
    %c0_i32_0 = arith.constant 0 : i32
    %c0_i32_1 = arith.constant 0 : i32
    return %arg0, %c0_i32, %c0_i32_0 : i32, i32, i32
  }
  func.func @transform_1(%arg0: i32) -> (i32, i32, i32) {
    %c0_i32 = arith.constant 0 : i32
    %c0_i32_0 = arith.constant 0 : i32
    %c0_i32_1 = arith.constant 0 : i32
    %c0_i32_2 = arith.constant 0 : i32
    return %c0_i32, %c0_i32_0, %c0_i32_1 : i32, i32, i32
  }
  func.func @transform_2(%arg0: i32) -> (i32, i32, i32) {
    %c0_i32 = arith.constant 0 : i32
    %c0_i32_0 = arith.constant 0 : i32
    %c0_i32_1 = arith.constant 0 : i32
    return %arg0, %c0_i32, %c0_i32_0 : i32, i32, i32
  }
  func.func @transform_3(%arg0: i32) -> (i32, i32, i32) {
    %c0_i32 = arith.constant 0 : i32
    %c0_i32_0 = arith.constant 0 : i32
    %c0_i32_1 = arith.constant 0 : i32
    return %arg0, %c0_i32, %c0_i32_0 : i32, i32, i32
  }
}

module attributes {stable_mosaic.version = 11 : i64} {
  func.func @_bn_relu_conv_stats_kernel(%arg0: i32, %arg1: memref<1x16x64xf32, #tpu.memory_space<vmem>>, %arg2: memref<1x64xf32, #tpu.memory_space<vmem>>, %arg3: memref<1x64xf32, #tpu.memory_space<vmem>>, %arg4: memref<3x64x64xf32, #tpu.memory_space<vmem>>, %arg5: memref<1x16x64xf32, #tpu.memory_space<vmem>>, %arg6: memref<1x2x64xf32, #tpu.memory_space<vmem>>) attributes {dimension_semantics = [#tpu.dimension_semantics<parallel>], iteration_bounds = array<i64: 2>, scalar_prefetch = 0 : i64, scratch_operands = 0 : i64, tpu.core_type = #tpu.core_type<tc>, window_params = [{transform_indices = @transform_0, window_bounds = array<i64: 1, 16, 64>}, {pipeline_mode = #tpu.pipeline_mode<synchronous>, transform_indices = @transform_1, window_bounds = array<i64: 1, 64>}, {pipeline_mode = #tpu.pipeline_mode<synchronous>, transform_indices = @transform_2, window_bounds = array<i64: 1, 64>}, {pipeline_mode = #tpu.pipeline_mode<synchronous>, transform_indices = @transform_3, window_bounds = array<i64: 3, 64, 64>}, {transform_indices = @transform_4, window_bounds = array<i64: 1, 16, 64>}, {transform_indices = @transform_5, window_bounds = array<i64: 1, 2, 64>}]} {
    %c0 = arith.constant 0 : index
    %c0_0 = arith.constant 0 : index
    %c0_1 = arith.constant 0 : index
    %0 = vector.load %arg1[%c0, %c0_0, %c0_1] : memref<1x16x64xf32, #tpu.memory_space<vmem>>, vector<1x16x64xf32>
    %c0_2 = arith.constant 0 : index
    %c0_3 = arith.constant 0 : index
    %1 = vector.load %arg2[%c0_2, %c0_3] : memref<1x64xf32, #tpu.memory_space<vmem>>, vector<1x64xf32>
    %2 = vector.shape_cast %1 : vector<1x64xf32> to vector<1x1x64xf32>
    %3 = vector.broadcast %2 : vector<1x1x64xf32> to vector<1x16x64xf32>
    %4 = arith.mulf %0, %3 : vector<1x16x64xf32>
    %c0_4 = arith.constant 0 : index
    %c0_5 = arith.constant 0 : index
    %5 = vector.load %arg3[%c0_4, %c0_5] : memref<1x64xf32, #tpu.memory_space<vmem>>, vector<1x64xf32>
    %6 = vector.shape_cast %5 : vector<1x64xf32> to vector<1x1x64xf32>
    %7 = vector.broadcast %6 : vector<1x1x64xf32> to vector<1x16x64xf32>
    %8 = arith.addf %4, %7 : vector<1x16x64xf32>
    %cst = arith.constant 0.000000e+00 : f32
    %9 = vector.broadcast %cst : f32 to vector<1x16x64xf32>
    %10 = arith.maximumf %8, %9 : vector<1x16x64xf32>
    %11 = vector.shape_cast %10 : vector<1x16x64xf32> to vector<16x64xf32>
    %c0_6 = arith.constant 0 : index
    %c0_7 = arith.constant 0 : index
    %c0_8 = arith.constant 0 : index
    %12 = vector.load %arg4[%c0_6, %c0_7, %c0_8] : memref<3x64x64xf32, #tpu.memory_space<vmem>>, vector<1x64x64xf32>
    %13 = vector.shape_cast %12 : vector<1x64x64xf32> to vector<64x64xf32>
    %cst_9 = arith.constant dense<0.000000e+00> : vector<16x64xf32>
    %14 = tpu.matmul %11, %13, %cst_9 {dimension_numbers = #tpu.dot_dimension_numbers<[1], [0], [0], [1], [0, 0, 1, 1], [], []>} : vector<16x64xf32>, vector<64x64xf32>, vector<16x64xf32> -> vector<16x64xf32>
    %15 = vector.shape_cast %14 : vector<16x64xf32> to vector<1x16x64xf32>
    %c1 = arith.constant 1 : index
    %c0_10 = arith.constant 0 : index
    %c0_11 = arith.constant 0 : index
    %16 = vector.load %arg4[%c1, %c0_10, %c0_11] : memref<3x64x64xf32, #tpu.memory_space<vmem>>, vector<1x64x64xf32>
    %17 = vector.shape_cast %16 : vector<1x64x64xf32> to vector<64x64xf32>
    %cst_12 = arith.constant dense<0.000000e+00> : vector<16x64xf32>
    %18 = tpu.matmul %11, %17, %cst_12 {dimension_numbers = #tpu.dot_dimension_numbers<[1], [0], [0], [1], [0, 0, 1, 1], [], []>} : vector<16x64xf32>, vector<64x64xf32>, vector<16x64xf32> -> vector<16x64xf32>
    %19 = vector.shape_cast %18 : vector<16x64xf32> to vector<1x16x64xf32>
    %c2 = arith.constant 2 : index
    %c0_13 = arith.constant 0 : index
    %c0_14 = arith.constant 0 : index
    %20 = vector.load %arg4[%c2, %c0_13, %c0_14] : memref<3x64x64xf32, #tpu.memory_space<vmem>>, vector<1x64x64xf32>
    %21 = vector.shape_cast %20 : vector<1x64x64xf32> to vector<64x64xf32>
    %cst_15 = arith.constant dense<0.000000e+00> : vector<16x64xf32>
    %22 = tpu.matmul %11, %21, %cst_15 {dimension_numbers = #tpu.dot_dimension_numbers<[1], [0], [0], [1], [0, 0, 1, 1], [], []>} : vector<16x64xf32>, vector<64x64xf32>, vector<16x64xf32> -> vector<16x64xf32>
    %23 = vector.shape_cast %22 : vector<16x64xf32> to vector<1x16x64xf32>
    %cst_16 = arith.constant 0.000000e+00 : f32
    %24 = vector.broadcast %cst_16 : f32 to vector<1x1x64xf32>
    %25 = vector.extract_strided_slice %15 {offsets = [0, 0, 0], sizes = [1, 15, 64], strides = [1, 1, 1]} : vector<1x16x64xf32> to vector<1x15x64xf32>
    %26 = tpu.concatenate %24, %25 in 1 : vector<1x1x64xf32>, vector<1x15x64xf32> -> vector<1x16x64xf32>
    %27 = arith.addf %19, %26 : vector<1x16x64xf32>
    %28 = vector.extract_strided_slice %23 {offsets = [0, 1, 0], sizes = [1, 15, 64], strides = [1, 1, 1]} : vector<1x16x64xf32> to vector<1x15x64xf32>
    %29 = tpu.concatenate %28, %24 in 1 : vector<1x15x64xf32>, vector<1x1x64xf32> -> vector<1x16x64xf32>
    %30 = arith.addf %27, %29 : vector<1x16x64xf32>
    %c0_17 = arith.constant 0 : index
    %c0_18 = arith.constant 0 : index
    %c0_19 = arith.constant 0 : index
    %31 = vector.load %arg5[%c0_17, %c0_18, %c0_19] : memref<1x16x64xf32, #tpu.memory_space<vmem>>, vector<1x16x64xf32>
    tpu.vector_store %arg5[%c0_17, %c0_18, %c0_19], %30 {strides = array<i32>} : memref<1x16x64xf32, #tpu.memory_space<vmem>>, vector<1x16x64xf32>,
    %32 = vector.shape_cast %30 : vector<1x16x64xf32> to vector<16x64xf32>
    %cst_20 = arith.constant dense<0.000000e+00> : vector<64xf32>
    %33 = vector.multi_reduction <add>, %32, %cst_20 [0] : vector<16x64xf32> to vector<64xf32>
    %34 = vector.shape_cast %33 : vector<64xf32> to vector<1x64xf32>
    %35 = vector.shape_cast %34 : vector<1x64xf32> to vector<1x1x64xf32>
    %c0_21 = arith.constant 0 : index
    %c0_22 = arith.constant 0 : index
    %c0_23 = arith.constant 0 : index
    %36 = vector.load %arg6[%c0_21, %c0_22, %c0_23] : memref<1x2x64xf32, #tpu.memory_space<vmem>>, vector<1x1x64xf32>
    tpu.vector_store %arg6[%c0_21, %c0_22, %c0_23], %35 {strides = array<i32>} : memref<1x2x64xf32, #tpu.memory_space<vmem>>, vector<1x1x64xf32>,
    %37 = arith.mulf %32, %32 : vector<16x64xf32>
    %cst_24 = arith.constant dense<0.000000e+00> : vector<64xf32>
    %38 = vector.multi_reduction <add>, %37, %cst_24 [0] : vector<16x64xf32> to vector<64xf32>
    %39 = vector.shape_cast %38 : vector<64xf32> to vector<1x64xf32>
    %40 = vector.shape_cast %39 : vector<1x64xf32> to vector<1x1x64xf32>
    %c0_25 = arith.constant 0 : index
    %c1_26 = arith.constant 1 : index
    %c0_27 = arith.constant 0 : index
    %41 = vector.load %arg6[%c0_25, %c1_26, %c0_27] : memref<1x2x64xf32, #tpu.memory_space<vmem>>, vector<1x1x64xf32>
    tpu.vector_store %arg6[%c0_25, %c1_26, %c0_27], %40 {strides = array<i32>} : memref<1x2x64xf32, #tpu.memory_space<vmem>>, vector<1x1x64xf32>,
    return
  }
  func.func @transform_0(%arg0: i32) -> (i32, i32, i32) {
    %c0_i32 = arith.constant 0 : i32
    %c0_i32_0 = arith.constant 0 : i32
    %c0_i32_1 = arith.constant 0 : i32
    return %arg0, %c0_i32, %c0_i32_0 : i32, i32, i32
  }
  func.func @transform_1(%arg0: i32) -> (i32, i32) {
    %c0_i32 = arith.constant 0 : i32
    %c0_i32_0 = arith.constant 0 : i32
    %c0_i32_1 = arith.constant 0 : i32
    return %c0_i32, %c0_i32_0 : i32, i32
  }
  func.func @transform_2(%arg0: i32) -> (i32, i32) {
    %c0_i32 = arith.constant 0 : i32
    %c0_i32_0 = arith.constant 0 : i32
    %c0_i32_1 = arith.constant 0 : i32
    return %c0_i32, %c0_i32_0 : i32, i32
  }
  func.func @transform_3(%arg0: i32) -> (i32, i32, i32) {
    %c0_i32 = arith.constant 0 : i32
    %c0_i32_0 = arith.constant 0 : i32
    %c0_i32_1 = arith.constant 0 : i32
    %c0_i32_2 = arith.constant 0 : i32
    return %c0_i32, %c0_i32_0, %c0_i32_1 : i32, i32, i32
  }
  func.func @transform_4(%arg0: i32) -> (i32, i32, i32) {
    %c0_i32 = arith.constant 0 : i32
    %c0_i32_0 = arith.constant 0 : i32
    %c0_i32_1 = arith.constant 0 : i32
    return %arg0, %c0_i32, %c0_i32_0 : i32, i32, i32
  }
  func.func @transform_5(%arg0: i32) -> (i32, i32, i32) {
    %c0_i32 = arith.constant 0 : i32
    %c0_i32_0 = arith.constant 0 : i32
    %c0_i32_1 = arith.constant 0 : i32
    return %arg0, %c0_i32, %c0_i32_0 : i32, i32, i32
  }
}

module attributes {stable_mosaic.version = 11 : i64} {
  func.func @_bn_add_relu_kernel(%arg0: i32, %arg1: memref<1x16x64xf32, #tpu.memory_space<vmem>>, %arg2: memref<1x64xf32, #tpu.memory_space<vmem>>, %arg3: memref<1x64xf32, #tpu.memory_space<vmem>>, %arg4: memref<1x16x64xf32, #tpu.memory_space<vmem>>, %arg5: memref<1x16x64xf32, #tpu.memory_space<vmem>>) attributes {dimension_semantics = [#tpu.dimension_semantics<parallel>], iteration_bounds = array<i64: 2>, scalar_prefetch = 0 : i64, scratch_operands = 0 : i64, tpu.core_type = #tpu.core_type<tc>, window_params = [{transform_indices = @transform_0, window_bounds = array<i64: 1, 16, 64>}, {pipeline_mode = #tpu.pipeline_mode<synchronous>, transform_indices = @transform_1, window_bounds = array<i64: 1, 64>}, {pipeline_mode = #tpu.pipeline_mode<synchronous>, transform_indices = @transform_2, window_bounds = array<i64: 1, 64>}, {transform_indices = @transform_3, window_bounds = array<i64: 1, 16, 64>}, {transform_indices = @transform_4, window_bounds = array<i64: 1, 16, 64>}]} {
    %c0 = arith.constant 0 : index
    %c0_0 = arith.constant 0 : index
    %c0_1 = arith.constant 0 : index
    %0 = vector.load %arg1[%c0, %c0_0, %c0_1] : memref<1x16x64xf32, #tpu.memory_space<vmem>>, vector<1x16x64xf32>
    %c0_2 = arith.constant 0 : index
    %c0_3 = arith.constant 0 : index
    %1 = vector.load %arg2[%c0_2, %c0_3] : memref<1x64xf32, #tpu.memory_space<vmem>>, vector<1x64xf32>
    %2 = vector.shape_cast %1 : vector<1x64xf32> to vector<1x1x64xf32>
    %3 = vector.broadcast %2 : vector<1x1x64xf32> to vector<1x16x64xf32>
    %4 = arith.mulf %0, %3 : vector<1x16x64xf32>
    %c0_4 = arith.constant 0 : index
    %c0_5 = arith.constant 0 : index
    %5 = vector.load %arg3[%c0_4, %c0_5] : memref<1x64xf32, #tpu.memory_space<vmem>>, vector<1x64xf32>
    %6 = vector.shape_cast %5 : vector<1x64xf32> to vector<1x1x64xf32>
    %7 = vector.broadcast %6 : vector<1x1x64xf32> to vector<1x16x64xf32>
    %8 = arith.addf %4, %7 : vector<1x16x64xf32>
    %c0_6 = arith.constant 0 : index
    %c0_7 = arith.constant 0 : index
    %c0_8 = arith.constant 0 : index
    %9 = vector.load %arg4[%c0_6, %c0_7, %c0_8] : memref<1x16x64xf32, #tpu.memory_space<vmem>>, vector<1x16x64xf32>
    %10 = arith.addf %8, %9 : vector<1x16x64xf32>
    %cst = arith.constant 0.000000e+00 : f32
    %11 = vector.broadcast %cst : f32 to vector<1x16x64xf32>
    %12 = arith.maximumf %10, %11 : vector<1x16x64xf32>
    %c0_9 = arith.constant 0 : index
    %c0_10 = arith.constant 0 : index
    %c0_11 = arith.constant 0 : index
    %13 = vector.load %arg5[%c0_9, %c0_10, %c0_11] : memref<1x16x64xf32, #tpu.memory_space<vmem>>, vector<1x16x64xf32>
    tpu.vector_store %arg5[%c0_9, %c0_10, %c0_11], %12 {strides = array<i32>} : memref<1x16x64xf32, #tpu.memory_space<vmem>>, vector<1x16x64xf32>,
    return
  }
  func.func @transform_0(%arg0: i32) -> (i32, i32, i32) {
    %c0_i32 = arith.constant 0 : i32
    %c0_i32_0 = arith.constant 0 : i32
    %c0_i32_1 = arith.constant 0 : i32
    return %arg0, %c0_i32, %c0_i32_0 : i32, i32, i32
  }
  func.func @transform_1(%arg0: i32) -> (i32, i32) {
    %c0_i32 = arith.constant 0 : i32
    %c0_i32_0 = arith.constant 0 : i32
    %c0_i32_1 = arith.constant 0 : i32
    return %c0_i32, %c0_i32_0 : i32, i32
  }
  func.func @transform_2(%arg0: i32) -> (i32, i32) {
    %c0_i32 = arith.constant 0 : i32
    %c0_i32_0 = arith.constant 0 : i32
    %c0_i32_1 = arith.constant 0 : i32
    return %c0_i32, %c0_i32_0 : i32, i32
  }
  func.func @transform_3(%arg0: i32) -> (i32, i32, i32) {
    %c0_i32 = arith.constant 0 : i32
    %c0_i32_0 = arith.constant 0 : i32
    %c0_i32_1 = arith.constant 0 : i32
    return %arg0, %c0_i32, %c0_i32_0 : i32, i32, i32
  }
  func.func @transform_4(%arg0: i32) -> (i32, i32, i32) {
    %c0_i32 = arith.constant 0 : i32
    %c0_i32_0 = arith.constant 0 : i32
    %c0_i32_1 = arith.constant 0 : i32
    return %arg0, %c0_i32, %c0_i32_0 : i32, i32, i32
  }
}

</mosaic_0001>

<llo_original>
// kernel: tile.23
$region0: #{tile.23}
  #allocation0 [shape = 's32[1]{0}', space=sflag, size = 0x4, scoped, tag = 'scoped memory for tile.23']
  %s0 = inlined_call_operand.vmem [shape: f32[4], index: 0, kind: input, shape index: {}]
  %s1 = inlined_call_operand.vmem [shape: f32[16,4], index: 1, kind: output, shape index: {}]
  // Predicated region
  $region2: #{tile.23} parent=0 // pred_check
    _
  $region3: #{tile.23} parent=0 // pred_check_branch
    %3 = sbr.rel (0) target = $region5
  $region4: #{tile.23} parent=0 // pred_region
    _
  $region5: #{tile.23} parent=0 // pred_fallthru
    _
  %v4 = vld [vmem:[%s0] ss:$0 sm:$0xff]
  %5 = vst [vmem:[%s1] sm:$0xff] %v4
  %s6 = scalar_lea.vmem %s1, 8
  %7 = vst [vmem:[%s6] sm:$0xff] %v4

// kernel: tile.24
$region0: #{tile.24}
  %s0 = inlined_call_operand.vmem [shape: f32[16,4], index: 0, kind: input, shape index: {}]
  %s1 = inlined_call_operand.vmem [shape: f32[1,64], index: 1, kind: output, shape index: {}]
  $region1: #{tile.24} parent=0
    #allocation0 [shape = 'u8[4096]{0}', space=vmem, size = 0x1000, scoped, tag = 'scoped mem for output reshape']
    %v2 = vld [vmem:[%s0] sm:$0x1]
    %vm3 = vcmask 31744
    %4 = vst.msk [vmem:[#allocation0] sm:$0x1] %vm3, %v2
    %s5 = scalar_lea.vmem %s0, 15
    %v6 = vld [vmem:[%s5] sm:$0x1]
    %7 = vrot.lane.b32.xlu0 %v6, 60
    %v8 = vpop.permute.xlu0 %7
    %vm9 = vcmask 523744
    %10 = vst.msk [vmem:[#allocation0] sm:$0x1] %vm9, %v8
    %s11 = scalar_lea.vmem %s0, 14
    %v12 = vld [vmem:[%s11] sm:$0x1]
    %13 = vrot.lane.b32.xlu0 %v12, 56
    %v14 = vpop.permute.xlu0 %13
    %vm15 = vcmask 490944
    %16 = vst.msk [vmem:[#allocation0] sm:$0x1] %vm15, %v14
    %s17 = scalar_lea.vmem %s0, 13
    %v18 = vld [vmem:[%s17] sm:$0x1]
    %19 = vrot.lane.b32.xlu0 %v18, 52
    %v20 = vpop.permute.xlu0 %19
    %vm21 = vcmask 458144
    %22 = vst.msk [vmem:[#allocation0] sm:$0x1] %vm21, %v20
    %s23 = scalar_lea.vmem %s0, 12
    %v24 = vld [vmem:[%s23] sm:$0x1]
    %25 = vrot.lane.b32.xlu0 %v24, 48
    %v26 = vpop.permute.xlu0 %25
    %vm27 = vcmask 425344
    %28 = vst.msk [vmem:[#allocation0] sm:$0x1] %vm27, %v26
    %s29 = scalar_lea.vmem %s0, 11
    %v30 = vld [vmem:[%s29] sm:$0x1]
    %31 = vrot.lane.b32.xlu0 %v30, 44
    %v32 = vpop.permute.xlu0 %31
    %vm33 = vcmask 392544
    %34 = vst.msk [vmem:[#allocation0] sm:$0x1] %vm33, %v32
    %s35 = scalar_lea.vmem %s0, 10
    %v36 = vld [vmem:[%s35] sm:$0x1]
    %37 = vrot.lane.b32.xlu0 %v36, 40
    %v38 = vpop.permute.xlu0 %37
    %vm39 = vcmask 359744
    %40 = vst.msk [vmem:[#allocation0] sm:$0x1] %vm39, %v38
    %s41 = scalar_lea.vmem %s0, 9
    %v42 = vld [vmem:[%s41] sm:$0x1]
    %43 = vrot.lane.b32.xlu0 %v42, 36
    %v44 = vpop.permute.xlu0 %43
    %vm45 = vcmask 326944
    %46 = vst.msk [vmem:[#allocation0] sm:$0x1] %vm45, %v44
    %s47 = scalar_lea.vmem %s0, 8
    %v48 = vld [vmem:[%s47] sm:$0x1]
    %49 = vrot.lane.b32.xlu0 %v48, 32
    %v50 = vpop.permute.xlu0 %49
    %vm51 = vcmask 294144
    %52 = vst.msk [vmem:[#allocation0] sm:$0x1] %vm51, %v50
    %s53 = scalar_lea.vmem %s0, 7
    %v54 = vld [vmem:[%s53] sm:$0x1]
    %55 = vrot.lane.b32.xlu0 %v54, 28
    %v56 = vpop.permute.xlu0 %55
    %vm57 = vcmask 261344
    %58 = vst.msk [vmem:[#allocation0] sm:$0x1] %vm57, %v56
    %s59 = scalar_lea.vmem %s0, 6
    %v60 = vld [vmem:[%s59] sm:$0x1]
    %61 = vrot.lane.b32.xlu0 %v60, 24
    %v62 = vpop.permute.xlu0 %61
    %vm63 = vcmask 228544
    %64 = vst.msk [vmem:[#allocation0] sm:$0x1] %vm63, %v62
    %s65 = scalar_lea.vmem %s0, 5
    %v66 = vld [vmem:[%s65] sm:$0x1]
    %67 = vrot.lane.b32.xlu0 %v66, 20
    %v68 = vpop.permute.xlu0 %67
    %vm69 = vcmask 195744
    %70 = vst.msk [vmem:[#allocation0] sm:$0x1] %vm69, %v68
    %s71 = scalar_lea.vmem %s0, 4
    %v72 = vld [vmem:[%s71] sm:$0x1]
    %73 = vrot.lane.b32.xlu0 %v72, 16
    %v74 = vpop.permute.xlu0 %73
    %vm75 = vcmask 162944
    %76 = vst.msk [vmem:[#allocation0] sm:$0x1] %vm75, %v74
    %s77 = scalar_lea.vmem %s0, 3
    %v78 = vld [vmem:[%s77] sm:$0x1]
    %79 = vrot.lane.b32.xlu0 %v78, 12
    %v80 = vpop.permute.xlu0 %79
    %vm81 = vcmask 130144
    %82 = vst.msk [vmem:[#allocation0] sm:$0x1] %vm81, %v80
    %s83 = scalar_lea.vmem %s0, 2
    %v84 = vld [vmem:[%s83] sm:$0x1]
    %85 = vrot.lane.b32.xlu0 %v84, 8
    %v86 = vpop.permute.xlu0 %85
    %vm87 = vcmask 97344
    %88 = vst.msk [vmem:[#allocation0] sm:$0x1] %vm87, %v86
    %s89 = scalar_lea.vmem %s0, 1
    %v90 = vld [vmem:[%s89] sm:$0x1]
    %91 = vrot.lane.b32.xlu0 %v90, 4
    %v92 = vpop.permute.xlu0 %91
    %vm93 = vcmask 64544
    %94 = vst.msk [vmem:[#allocation0] sm:$0x1] %vm93, %v92
    %s96 = sshllo.u32 0, 1
    %v98 = vld [vmem:[#allocation0] sm:%s96]
    %s99 = sshllo.u32 0, 1
    %100 = vst [vmem:[%s1] sm:%s99] %v98

// kernel: block_forward.3
$region0: #{block_forward.3}
  #allocation0 [shape = 'u32[]', space=smem, size = 0x4, offset = 0x4, fixed_abs, tag = 'smem constant byte address 0x4 - core index']
  #allocation1 [shape = 'u32[144,128]{1,0:T(1,128)}', space=vmem, size = 0x12000, scoped, tag = 'internal scratch']
  %s0 = inlined_call_operand.vmem [shape: f32[2,16,64], index: 0, kind: input, shape index: {}]
  %s1 = inlined_call_operand.vmem [shape: f32[3,64,64], index: 1, kind: input, shape index: {}]
  %s2 = inlined_call_operand.vmem [shape: f32[2,16,64], index: 2, kind: output, shape index: {0}]
  %s3 = inlined_call_operand.vmem [shape: f32[2,2,64], index: 3, kind: output, shape index: {1}]
  %4 = xla_tuple %s2, %s3
  %s5 = sld [smem:[#allocation0]]
  $region49: #{block_forward.3} parent=0
    _
  %s7 = ssub.s32 1, %s5
  %s8 = scalar_select 0, %s7, %s5
  loop: start=0, step=1, limit=4
  $region2: #{block_forward.3} parent=0 // loop_pre_header
    _
  $region3: #{block_forward.3} parent=0 // loop_header
    %s10 = sphi 0, %s14
    %p11 = scmp.ge.s32.totalorder %s10, 4
    %s20 = sphi 0, %s22
    %s23 = sphi 0, %s20
    %s24 = sphi 0, %s23
    %s40 = sphi 0, %s24
    %s44 = sphi 0, %s44
    %s46 = sphi 0, %s44
    %s47 = sphi 0, %s46
    %s61 = sphi 0, %s47
    %s67 = sphi 0, %s69
    %s70 = sphi 0, %s67
    %s71 = sphi 0, %s70
    %s87 = sphi 0, %s71
    %s93 = sphi 0, %s95
    %s96 = sphi 0, %s93
    %s97 = sphi 0, %s96
    %s113 = sphi 0, %s97
  $region4: #{block_forward.3} parent=0 // loop_header_branch
    %13 = sbr.rel (%p11) target = $region8
  $region5: #{block_forward.3} parent=0 // loop_body
    %s15 = ssub.s32 %s10, 1
    %s16 = ssub.s32 %s10, 2
    %s17 = sadd.s32 %s10, 1
    %s18 = ssub.s32 %s10, %s17
    %p19 = scmp.eq.s32.totalorder %s18, 0
    %s21 = sadd.s32 %s20, 1
    %s22 = scalar_select %p19, %s20, %s21
    %p25 = pneg %p19
    %p26 = scmp.eq.s32.totalorder %s10, 1
    %p27 = por %p25, %p26
    %p28 = scmp.ne.s32.totalorder %s20, %s23
    %p29 = scmp.eq.s32.totalorder %s10, 0
    %p30 = por %p28, %p29
    %p31 = scmp.ne.s32.totalorder %s20, %s23
    %p32 = scmp.eq.s32.totalorder %s15, 1
    %p33 = por %p31, %p32
    %p34 = scmp.ne.s32.totalorder %s23, %s24
    %p35 = scmp.eq.s32.totalorder %s15, 0
    %p36 = por %p34, %p35
    %p37 = scmp.ne.s32.totalorder %s23, %s24
    %p38 = scmp.eq.s32.totalorder %s16, 1
    %p39 = por %p37, %p38
    %p41 = scmp.ne.s32.totalorder %s24, %s40
    %p42 = scmp.eq.s32.totalorder %s16, 0
    %p43 = por %p41, %p42
    %s45 = sadd.s32 %s44, 1
    %p48 = scmp.eq.s32.totalorder %s10, 1
    %p49 = scmp.ne.s32.totalorder %s44, %s46
    %p50 = scmp.eq.s32.totalorder %s10, 0
    %p51 = por %p49, %p50
    %p52 = scmp.ne.s32.totalorder %s44, %s46
    %p53 = scmp.eq.s32.totalorder %s15, 1
    %p54 = por %p52, %p53
    %p55 = scmp.ne.s32.totalorder %s46, %s47
    %p56 = scmp.eq.s32.totalorder %s15, 0
    %p57 = por %p55, %p56
    %p58 = scmp.ne.s32.totalorder %s46, %s47
    %p59 = scmp.eq.s32.totalorder %s16, 1
    %p60 = por %p58, %p59
    %p62 = scmp.ne.s32.totalorder %s47, %s61
    %p63 = scmp.eq.s32.totalorder %s16, 0
    %p64 = por %p62, %p63
    %s65 = ssub.s32 %s10, %s17
    %p66 = scmp.eq.s32.totalorder %s65, 0
    %s68 = sadd.s32 %s67, 1
    %s69 = scalar_select %p66, %s67, %s68
    %p72 = pneg %p66
    %p73 = scmp.eq.s32.totalorder %s10, 1
    %p74 = por %p72, %p73
    %p75 = scmp.ne.s32.totalorder %s67, %s70
    %p76 = scmp.eq.s32.totalorder %s10, 0
    %p77 = por %p75, %p76
    %p78 = scmp.ne.s32.totalorder %s67, %s70
    %p79 = scmp.eq.s32.totalorder %s15, 1
    %p80 = por %p78, %p79
    %p81 = scmp.ne.s32.totalorder %s70, %s71
    %p82 = scmp.eq.s32.totalorder %s15, 0
    %p83 = por %p81, %p82
    %p84 = scmp.ne.s32.totalorder %s70, %s71
    %p85 = scmp.eq.s32.totalorder %s16, 1
    %p86 = por %p84, %p85
    %p88 = scmp.ne.s32.totalorder %s71, %s87
    %p89 = scmp.eq.s32.totalorder %s16, 0
    %p90 = por %p88, %p89
    %s91 = ssub.s32 %s10, %s17
    %p92 = scmp.eq.s32.totalorder %s91, 0
    %s94 = sadd.s32 %s93, 1
    %s95 = scalar_select %p92, %s93, %s94
    %p98 = pneg %p92
    %p99 = scmp.eq.s32.totalorder %s10, 1
    %p100 = por %p98, %p99
    %p101 = scmp.ne.s32.totalorder %s93, %s96
    %p102 = scmp.eq.s32.totalorder %s10, 0
    %p103 = por %p101, %p102
    %p104 = scmp.ne.s32.totalorder %s93, %s96
    %p105 = scmp.eq.s32.totalorder %s15, 1
    %p106 = por %p104, %p105
    %p107 = scmp.ne.s32.totalorder %s96, %s97
    %p108 = scmp.eq.s32.totalorder %s15, 0
    %p109 = por %p107, %p108
    %p110 = scmp.ne.s32.totalorder %s96, %s97
    %p111 = scmp.eq.s32.totalorder %s16, 1
    %p112 = por %p110, %p111
    %p114 = scmp.ne.s32.totalorder %s97, %s113
    %p115 = scmp.eq.s32.totalorder %s16, 0
    %p116 = por %p114, %p115
    %p117 = scmp.le.s32.totalorder 1, %s10
    %p118 = scmp.lt.s32.totalorder %s10, 3
    %p119 = pnand %p117, %p118
    %p120 = pneg %p119
    // Predicated region
    $region9: #{block_forward.3} parent=5 // pred_check
      _
    $region10: #{block_forward.3} parent=5 // pred_check_branch
      %122 = sbr.rel (%p119) target = $region12
    $region11: #{block_forward.3} parent=5 // pred_region
      %s123 = ssub.s32 %s10, 1
      // Predicated region
      $region13: #{block_forward.3} parent=11 // pred_check
        %p124 = pneg %p57
      $region14: #{block_forward.3} parent=11 // pred_check_branch
        %126 = sbr.rel (%p124) target = $region16
      $region15: #{block_forward.3} parent=11 // pred_region
        _
      $region16: #{block_forward.3} parent=11 // pred_fallthru
        _
    $region12: #{block_forward.3} parent=5 // pred_fallthru
      _
    %p127 = scmp.lt.s32.totalorder %s10, 2
    // Predicated region
    $region17: #{block_forward.3} parent=5 // pred_check
      %p128 = pneg %p127
    $region18: #{block_forward.3} parent=5 // pred_check_branch
      %130 = sbr.rel (%p128) target = $region20
    $region19: #{block_forward.3} parent=5 // pred_region
      // Predicated region
      $region21: #{block_forward.3} parent=19 // pred_check
        %p131 = pneg %p30
      $region22: #{block_forward.3} parent=19 // pred_check_branch
        %133 = sbr.rel (%p131) target = $region24
      $region23: #{block_forward.3} parent=19 // pred_region
        %p134 = scmp.lt.s32.totalorder %s10, 1
        %s135 = scalar_select %p134, %s10, 1
        %s136 = smul.addr %s135, 2
        %s137 = smul.addr %s136, 8
        %s138 = scalar_lea.vmem %s0, %s137
      $region24: #{block_forward.3} parent=19 // pred_fallthru
        _
    $region20: #{block_forward.3} parent=5 // pred_fallthru
      _
    %p139 = scmp.le.s32.totalorder 1, %s10
    %p140 = scmp.lt.s32.totalorder %s10, 3
    %p141 = pnand %p139, %p140
    %p142 = pneg %p141
    // Predicated region
    $region25: #{block_forward.3} parent=5 // pred_check
      _
    $region26: #{block_forward.3} parent=5 // pred_check_branch
      %144 = sbr.rel (%p141) target = $region28
    $region27: #{block_forward.3} parent=5 // pred_region
      %s145 = ssub.s32 %s10, 1
      %p146 = scmp.lt.s32.totalorder %s15, 1
      %s147 = scalar_select %p146, %s15, 1
      %s148 = smul.addr %s147, 2
      %s149 = smul.addr %s148, 8
      %s150 = scalar_lea.vmem %s0, %s149
      %p151 = pneg %p36
      %p152 = pneg %p33
      %p153 = pneg %p57
      %p154 = pneg %p54
      %p155 = pneg %p83
      %p156 = pneg %p80
      %p157 = scmp.lt.s32.totalorder %s15, 1
      %s158 = scalar_select %p157, %s15, 1
      %s159 = smul.addr %s158, 2
      %s160 = smul.addr %s159, 8
      %s161 = scalar_lea.vmem %s2, %s160
      %p162 = pneg %p109
      %p163 = pneg %p106
      %p164 = scmp.lt.s32.totalorder %s15, 1
      %s165 = scalar_select %p164, %s15, 1
      %s166 = smul.addr %s165, 2
      %s167 = scalar_lea.vmem %s3, %s166
      %p168 = scmp.lt.s32.totalorder %s15, 1
      %s169 = scalar_select %p168, %s15, 1
      %s170 = smul.addr %s169, 2
      %s171 = smul.addr %s170, 8
      %s172 = scalar_lea.vmem %s0, %s171
      %p173 = scmp.lt.s32.totalorder %s15, 1
      %s174 = scalar_select %p173, %s15, 1
      %s175 = smul.addr %s174, 2
      %s176 = smul.addr %s175, 8
      %s177 = scalar_lea.vmem %s2, %s176
      %p178 = scmp.lt.s32.totalorder %s15, 1
      %s179 = scalar_select %p178, %s15, 1
      %s180 = smul.addr %s179, 2
      %s181 = scalar_lea.vmem %s3, %s180
      %v182 = vld [vmem:[%s172] sm:$0xff]
      %v183 = vld [vmem:[%s172 + $0x8] sm:$0xff]
      %v184 = vld [vmem:[%s1] sm:$0xff]
      %v185 = vld [vmem:[%s1 + $0x8] sm:$0xff]
      %v186 = vld [vmem:[%s1 + $0x10] sm:$0xff]
      %v187 = vld [vmem:[%s1 + $0x18] sm:$0xff]
      %v188 = vld [vmem:[%s1 + $0x20] sm:$0xff]
      %v189 = vld [vmem:[%s1 + $0x28] sm:$0xff]
      %v190 = vld [vmem:[%s1 + $0x30] sm:$0xff]
      %v191 = vld [vmem:[%s1 + $0x38] sm:$0xff]
      %vm192 = vcmask 523264
      %v194 = vsel %vm192, %v182, 0
      %v197 = vsel %vm192, %v183, 0
      %199 = vmatprep.subr.mxu0 0.0
      %200 = vmatpush1.msra.mxu0 %v184
      %201 = vmatprep.subr.mxu0 0.0
      %202 = vmatpush1.msra.mxu0 %v185
      %203 = vmatprep.subr.mxu0 0.0
      %204 = vmatpush1.msra.mxu0 %v186
      %205 = vmatprep.subr.mxu0 0.0
      %206 = vmatpush1.msra.mxu0 %v187
      %207 = vmatprep.subr.mxu0 0.0
      %208 = vmatpush1.msra.mxu0 %v188
      %209 = vmatprep.subr.mxu0 0.0
      %210 = vmatpush1.msra.mxu0 %v189
      %211 = vmatprep.subr.mxu0 0.0
      %212 = vmatpush1.msra.mxu0 %v190
      %213 = vmatprep.subr.mxu0 0.0
      %214 = vmatpush1.msra.mxu0 %v191
      %215 = vmatprep.subr.mxu0 0.0
      %216 = vmatpush1.msra.mxu0 0.0
      %217 = vmatprep.subr.mxu0 0.0
      %218 = vmatpush1.msra.mxu0 0.0
      %219 = vmatprep.subr.mxu0 0.0
      %220 = vmatpush1.msra.mxu0 0.0
      %221 = vmatprep.subr.mxu0 0.0
      %222 = vmatpush1.msra.mxu0 0.0
      %223 = vmatprep.subr.mxu0 0.0
      %224 = vmatpush1.msra.mxu0 0.0
      %225 = vmatprep.subr.mxu0 0.0
      %226 = vmatpush1.msra.mxu0 0.0
      %227 = vmatprep.subr.mxu0 0.0
      %228 = vmatpush1.msra.mxu0 0.0
      %229 = vmatprep.subr.mxu0 0.0
      %230 = vmatpush1.msra.mxu0 0.0
      %231 = vmatprep.subr.mxu0 0.0
      %232 = vmatpush1.msra.mxu0 0.0
      %233 = vmatprep.subr.mxu0 0.0
      %234 = vmatpush1.msra.mxu0 0.0
      %235 = vmatprep.subr.mxu0 0.0
      %236 = vmatpush1.msra.mxu0 0.0
      %237 = vmatprep.subr.mxu0 0.0
      %238 = vmatpush1.msra.mxu0 0.0
      %239 = vmatprep.subr.mxu0 0.0
      %240 = vmatpush1.msra.mxu0 0.0
      %241 = vmatprep.subr.mxu0 0.0
      %242 = vmatpush1.msra.mxu0 0.0
      %243 = vmatprep.subr.mxu0 0.0
      %244 = vmatpush1.msra.mxu0 0.0
      %245 = vmatprep.subr.mxu0 0.0
      %246 = vmatpush1.msra.mxu0 0.0
      %247 = vmatprep.subr.mxu0 0.0
      %248 = vmatpush1.msra.mxu0 0.0
      %249 = vmatprep.subr.mxu0 0.0
      %250 = vmatpush1.msra.mxu0 0.0
      %251 = vmatprep.subr.mxu0 0.0
      %252 = vmatpush1.msra.mxu0 0.0
      %253 = vmatprep.subr.mxu0 0.0
      %254 = vmatpush1.msra.mxu0 0.0
      %255 = vmatprep.subr.mxu0 0.0
      %256 = vmatpush1.msra.mxu0 0.0
      %257 = vmatprep.subr.mxu0 0.0
      %258 = vmatpush1.msra.mxu0 0.0
      %259 = vmatprep.subr.mxu0 0.0
      %260 = vmatpush1.msra.mxu0 0.0
      %261 = vmatprep.subr.mxu0 0.0
      %262 = vmatpush1.msra.mxu0 0.0
      %263 = vmatprep.mubr.f32.mxu0 0.0
      %264 = vmatmul.mubr.f32.gmra.mrb[0].mxu0 %v194
      %v265 = vpop.f32.mrb[0].mxu0
      %v266 = vadd.f32 0.0, %v265
      %v267 = vpop.f32.mrb[0].mxu0
      %268 = vmatprep.mubr.f32.mxu0 0.0
      %269 = vmatmul.mubr.f32.gmra.mrb[0].mxu0 %v197
      %v270 = vpop.f32.mrb[0].mxu0
      %v271 = vadd.f32 0.0, %v270
      %v272 = vpop.f32.mrb[0].mxu0
      %273 = vdwg.mxu0
      %s274 = scalar_lea.vmem %s1, 64
      %v275 = vld [vmem:[%s274] sm:$0xff]
      %v276 = vld [vmem:[%s274 + $0x8] sm:$0xff]
      %v277 = vld [vmem:[%s274 + $0x10] sm:$0xff]
      %v278 = vld [vmem:[%s274 + $0x18] sm:$0xff]
      %v279 = vld [vmem:[%s274 + $0x20] sm:$0xff]
      %v280 = vld [vmem:[%s274 + $0x28] sm:$0xff]
      %v281 = vld [vmem:[%s274 + $0x30] sm:$0xff]
      %v282 = vld [vmem:[%s274 + $0x38] sm:$0xff]
      %283 = vmatprep.subr.mxu0 0.0
      %284 = vmatpush1.msra.mxu0 %v275
      %285 = vmatprep.subr.mxu0 0.0
      %286 = vmatpush1.msra.mxu0 %v276
      %287 = vmatprep.subr.mxu0 0.0
      %288 = vmatpush1.msra.mxu0 %v277
      %289 = vmatprep.subr.mxu0 0.0
      %290 = vmatpush1.msra.mxu0 %v278
      %291 = vmatprep.subr.mxu0 0.0
      %292 = vmatpush1.msra.mxu0 %v279
      %293 = vmatprep.subr.mxu0 0.0
      %294 = vmatpush1.msra.mxu0 %v280
      %295 = vmatprep.subr.mxu0 0.0
      %296 = vmatpush1.msra.mxu0 %v281
      %297 = vmatprep.subr.mxu0 0.0
      %298 = vmatpush1.msra.mxu0 %v282
      %299 = vmatprep.subr.mxu0 0.0
      %300 = vmatpush1.msra.mxu0 0.0
      %301 = vmatprep.subr.mxu0 0.0
      %302 = vmatpush1.msra.mxu0 0.0
      %303 = vmatprep.subr.mxu0 0.0
      %304 = vmatpush1.msra.mxu0 0.0
      %305 = vmatprep.subr.mxu0 0.0
      %306 = vmatpush1.msra.mxu0 0.0
      %307 = vmatprep.subr.mxu0 0.0
      %308 = vmatpush1.msra.mxu0 0.0
      %309 = vmatprep.subr.mxu0 0.0
      %310 = vmatpush1.msra.mxu0 0.0
      %311 = vmatprep.subr.mxu0 0.0
      %312 = vmatpush1.msra.mxu0 0.0
      %313 = vmatprep.subr.mxu0 0.0
      %314 = vmatpush1.msra.mxu0 0.0
      %315 = vmatprep.subr.mxu0 0.0
      %316 = vmatpush1.msra.mxu0 0.0
      %317 = vmatprep.subr.mxu0 0.0
      %318 = vmatpush1.msra.mxu0 0.0
      %319 = vmatprep.subr.mxu0 0.0
      %320 = vmatpush1.msra.mxu0 0.0
      %321 = vmatprep.subr.mxu0 0.0
      %322 = vmatpush1.msra.mxu0 0.0
      %323 = vmatprep.subr.mxu0 0.0
      %324 = vmatpush1.msra.mxu0 0.0
      %325 = vmatprep.subr.mxu0 0.0
      %326 = vmatpush1.msra.mxu0 0.0
      %327 = vmatprep.subr.mxu0 0.0
      %328 = vmatpush1.msra.mxu0 0.0
      %329 = vmatprep.subr.mxu0 0.0
      %330 = vmatpush1.msra.mxu0 0.0
      %331 = vmatprep.subr.mxu0 0.0
      %332 = vmatpush1.msra.mxu0 0.0
      %333 = vmatprep.subr.mxu0 0.0
      %334 = vmatpush1.msra.mxu0 0.0
      %335 = vmatprep.subr.mxu0 0.0
      %336 = vmatpush1.msra.mxu0 0.0
      %337 = vmatprep.subr.mxu0 0.0
      %338 = vmatpush1.msra.mxu0 0.0
      %339 = vmatprep.subr.mxu0 0.0
      %340 = vmatpush1.msra.mxu0 0.0
      %341 = vmatprep.subr.mxu0 0.0
      %342 = vmatpush1.msra.mxu0 0.0
      %343 = vmatprep.subr.mxu0 0.0
      %344 = vmatpush1.msra.mxu0 0.0
      %345 = vmatprep.subr.mxu0 0.0
      %346 = vmatpush1.msra.mxu0 0.0
      %347 = vmatprep.mubr.f32.mxu0 0.0
      %348 = vmatmul.mubr.f32.gmra.mrb[0].mxu0 %v194
      %v349 = vpop.f32.mrb[0].mxu0
      %v350 = vadd.f32 0.0, %v349
      %v351 = vpop.f32.mrb[0].mxu0
      %352 = vmatprep.mubr.f32.mxu0 0.0
      %353 = vmatmul.mubr.f32.gmra.mrb[0].mxu0 %v197
      %v354 = vpop.f32.mrb[0].mxu0
      %v355 = vadd.f32 0.0, %v354
      %v356 = vpop.f32.mrb[0].mxu0
      %357 = vdwg.mxu0
      %s358 = scalar_lea.vmem %s1, 128
      %v359 = vld [vmem:[%s358] sm:$0xff]
      %v360 = vld [vmem:[%s358 + $0x8] sm:$0xff]
      %v361 = vld [vmem:[%s358 + $0x10] sm:$0xff]
      %v362 = vld [vmem:[%s358 + $0x18] sm:$0xff]
      %v363 = vld [vmem:[%s358 + $0x20] sm:$0xff]
      %v364 = vld [vmem:[%s358 + $0x28] sm:$0xff]
      %v365 = vld [vmem:[%s358 + $0x30] sm:$0xff]
      %v366 = vld [vmem:[%s358 + $0x38] sm:$0xff]
      %367 = vmatprep.subr.mxu0 0.0
      %368 = vmatpush1.msra.mxu0 %v359
      %369 = vmatprep.subr.mxu0 0.0
      %370 = vmatpush1.msra.mxu0 %v360
      %371 = vmatprep.subr.mxu0 0.0
      %372 = vmatpush1.msra.mxu0 %v361
      %373 = vmatprep.subr.mxu0 0.0
      %374 = vmatpush1.msra.mxu0 %v362
      %375 = vmatprep.subr.mxu0 0.0
      %376 = vmatpush1.msra.mxu0 %v363
      %377 = vmatprep.subr.mxu0 0.0
      %378 = vmatpush1.msra.mxu0 %v364
      %379 = vmatprep.subr.mxu0 0.0
      %380 = vmatpush1.msra.mxu0 %v365
      %381 = vmatprep.subr.mxu0 0.0
      %382 = vmatpush1.msra.mxu0 %v366
      %383 = vmatprep.subr.mxu0 0.0
      %384 = vmatpush1.msra.mxu0 0.0
      %385 = vmatprep.subr.mxu0 0.0
      %386 = vmatpush1.msra.mxu0 0.0
      %387 = vmatprep.subr.mxu0 0.0
      %388 = vmatpush1.msra.mxu0 0.0
      %389 = vmatprep.subr.mxu0 0.0
      %390 = vmatpush1.msra.mxu0 0.0
      %391 = vmatprep.subr.mxu0 0.0
      %392 = vmatpush1.msra.mxu0 0.0
      %393 = vmatprep.subr.mxu0 0.0
      %394 = vmatpush1.msra.mxu0 0.0
      %395 = vmatprep.subr.mxu0 0.0
      %396 = vmatpush1.msra.mxu0 0.0
      %397 = vmatprep.subr.mxu0 0.0
      %398 = vmatpush1.msra.mxu0 0.0
      %399 = vmatprep.subr.mxu0 0.0
      %400 = vmatpush1.msra.mxu0 0.0
      %401 = vmatprep.subr.mxu0 0.0
      %402 = vmatpush1.msra.mxu0 0.0
      %403 = vmatprep.subr.mxu0 0.0
      %404 = vmatpush1.msra.mxu0 0.0
      %405 = vmatprep.subr.mxu0 0.0
      %406 = vmatpush1.msra.mxu0 0.0
      %407 = vmatprep.subr.mxu0 0.0
      %408 = vmatpush1.msra.mxu0 0.0
      %409 = vmatprep.subr.mxu0 0.0
      %410 = vmatpush1.msra.mxu0 0.0
      %411 = vmatprep.subr.mxu0 0.0
      %412 = vmatpush1.msra.mxu0 0.0
      %413 = vmatprep.subr.mxu0 0.0
      %414 = vmatpush1.msra.mxu0 0.0
      %415 = vmatprep.subr.mxu0 0.0
      %416 = vmatpush1.msra.mxu0 0.0
      %417 = vmatprep.subr.mxu0 0.0
      %418 = vmatpush1.msra.mxu0 0.0
      %419 = vmatprep.subr.mxu0 0.0
      %420 = vmatpush1.msra.mxu0 0.0
      %421 = vmatprep.subr.mxu0 0.0
      %422 = vmatpush1.msra.mxu0 0.0
      %423 = vmatprep.subr.mxu0 0.0
      %424 = vmatpush1.msra.mxu0 0.0
      %425 = vmatprep.subr.mxu0 0.0
      %426 = vmatpush1.msra.mxu0 0.0
      %427 = vmatprep.subr.mxu0 0.0
      %428 = vmatpush1.msra.mxu0 0.0
      %429 = vmatprep.subr.mxu0 0.0
      %430 = vmatpush1.msra.mxu0 0.0
      %431 = vmatprep.mubr.f32.mxu0 0.0
      %432 = vmatmul.mubr.f32.gmra.mrb[0].mxu0 %v194
      %v433 = vpop.f32.mrb[0].mxu0
      %v434 = vadd.f32 0.0, %v433
      %v435 = vpop.f32.mrb[0].mxu0
      %436 = vmatprep.mubr.f32.mxu0 0.0
      %437 = vmatmul.mubr.f32.gmra.mrb[0].mxu0 %v197
      %v438 = vpop.f32.mrb[0].mxu0
      %v439 = vadd.f32 0.0, %v438
      %v440 = vpop.f32.mrb[0].mxu0
      %441 = vdwg.mxu0
      %vm444 = vcmask 1040384
      %v445 = vrot.slane %v266, 7
      %v446 = vrot.slane %v271, 7
      %v447 = vsel %vm444, %v445, %v446
      %v450 = vsel %vm444, 0.0, %v445
      %v451 = vadd.f32 %v350, %v450
      %v452 = vadd.f32 %v355, %v447
      %vm455 = vcmask 1046528
      %v456 = vrot.slane %v434, 1
      %v457 = vrot.slane %v439, 1
      %v458 = vsel %vm455, %v456, %v457
      %v461 = vsel %vm455, %v457, 0.0
      %v462 = vadd.f32 %v451, %v458
      %v463 = vadd.f32 %v452, %v461
      %464 = vst.msk [vmem:[%s177] sm:$0xff] %vm192, %v462
      %465 = vst.msk [vmem:[%s177 + $0x8] sm:$0xff] %vm192, %v463
      %v466 = vsel %vm192, %v462, 0.0
      %v467 = vsel %vm192, %v463, 0.0
      %v468 = vadd.f32 %v466, %v467
      %v469 = vrot.slane %v468, 4
      %v470 = vadd.f32 %v468, %v469
      %v471 = vrot.slane %v470, 2
      %v472 = vadd.f32 %v470, %v471
      %v473 = vrot.slane %v472, 1
      %v474 = vadd.f32 %v472, %v473
      %vm475 = vcmask 516096
      %476 = vst.msk [vmem:[%s181] sm:$0x1] %vm475, %v474
      %v477 = vmul.f32 %v462, %v462
      %v478 = vmul.f32 %v463, %v463
      %v479 = vsel %vm192, %v477, 0.0
      %v480 = vsel %vm192, %v478, 0.0
      %v481 = vadd.f32 %v479, %v480
      %v482 = vrot.slane %v481, 4
      %v483 = vadd.f32 %v481, %v482
      %v484 = vrot.slane %v483, 2
      %v485 = vadd.f32 %v483, %v484
      %v486 = vrot.slane %v485, 1
      %v487 = vadd.f32 %v485, %v486
      %488 = vst.msk [vmem:[%s181 + $0x1] sm:$0x1] %vm475, %v487
      %p489 = scmp.lt.s32.totalorder %s15, 1
      %s490 = scalar_select %p489, %s15, 1
      %s491 = smul.addr %s490, 2
      %s492 = smul.addr %s491, 8
      %s493 = scalar_lea.vmem %s2, %s492
      %p494 = scmp.lt.s32.totalorder %s15, 1
      %s495 = scalar_select %p494, %s15, 1
      %s496 = smul.addr %s495, 2
      %s497 = scalar_lea.vmem %s3, %s496
      // Predicated region
      $region29: #{block_forward.3} parent=27 // pred_check
        %p498 = pneg %p80
      $region30: #{block_forward.3} parent=27 // pred_check_branch
        %500 = sbr.rel (%p498) target = $region32
      $region31: #{block_forward.3} parent=27 // pred_region
        _
      $region32: #{block_forward.3} parent=27 // pred_fallthru
        _
      // Predicated region
      $region33: #{block_forward.3} parent=27 // pred_check
        %p501 = pneg %p106
      $region34: #{block_forward.3} parent=27 // pred_check_branch
        %503 = sbr.rel (%p501) target = $region36
      $region35: #{block_forward.3} parent=27 // pred_region
        _
      $region36: #{block_forward.3} parent=27 // pred_fallthru
        _
    $region28: #{block_forward.3} parent=5 // pred_fallthru
      _
    %p504 = scmp.le.s32.totalorder 2, %s10
    // Predicated region
    $region37: #{block_forward.3} parent=5 // pred_check
      %p505 = pneg %p504
    $region38: #{block_forward.3} parent=5 // pred_check_branch
      %507 = sbr.rel (%p505) target = $region40
    $region39: #{block_forward.3} parent=5 // pred_region
      %s508 = ssub.s32 %s10, 2
      // Predicated region
      $region41: #{block_forward.3} parent=39 // pred_check
        %p509 = pneg %p86
      $region42: #{block_forward.3} parent=39 // pred_check_branch
        %511 = sbr.rel (%p509) target = $region44
      $region43: #{block_forward.3} parent=39 // pred_region
        %p512 = scmp.lt.s32.totalorder %s16, 1
        %s513 = scalar_select %p512, %s16, 1
        %s514 = smul.addr %s513, 2
        %s515 = smul.addr %s514, 8
        %s516 = scalar_lea.vmem %s2, %s515
      $region44: #{block_forward.3} parent=39 // pred_fallthru
        _
      // Predicated region
      $region45: #{block_forward.3} parent=39 // pred_check
        %p517 = pneg %p112
      $region46: #{block_forward.3} parent=39 // pred_check_branch
        %519 = sbr.rel (%p517) target = $region48
      $region47: #{block_forward.3} parent=39 // pred_region
        %p520 = scmp.lt.s32.totalorder %s16, 1
        %s521 = scalar_select %p520, %s16, 1
        %s522 = smul.addr %s521, 2
        %s523 = scalar_lea.vmem %s3, %s522
      $region48: #{block_forward.3} parent=39 // pred_fallthru
        _
    $region40: #{block_forward.3} parent=5 // pred_fallthru
      _
  $region6: #{block_forward.3} parent=0 // loop_footer
    %s14 = sadd.s32 1, %s10
  $region7: #{block_forward.3} parent=0 // loop_footer_branch
    %9 = sbr.rel target = $region3
  $region8: #{block_forward.3} parent=0 // loop_exit
    _

// kernel: block_forward.4
$region0: #{block_forward.4}
  #allocation0 [shape = 'u32[]', space=smem, size = 0x4, offset = 0x4, fixed_abs, tag = 'smem constant byte address 0x4 - core index']
  #allocation1 [shape = 'u32[144,128]{1,0:T(1,128)}', space=vmem, size = 0x12000, scoped, tag = 'internal scratch']
  %s0 = inlined_call_operand.vmem [shape: f32[2,16,64], index: 0, kind: input, shape index: {}]
  %s1 = inlined_call_operand.vmem [shape: f32[1,64], index: 1, kind: input, shape index: {}]
  %s2 = inlined_call_operand.vmem [shape: f32[1,64], index: 2, kind: input, shape index: {}]
  %s3 = inlined_call_operand.vmem [shape: f32[3,64,64], index: 3, kind: input, shape index: {}]
  %s4 = inlined_call_operand.vmem [shape: f32[2,16,64], index: 4, kind: output, shape index: {0}]
  %s5 = inlined_call_operand.vmem [shape: f32[2,2,64], index: 5, kind: output, shape index: {1}]
  %6 = xla_tuple %s4, %s5
  %s7 = sld [smem:[#allocation0]]
  $region57: #{block_forward.4} parent=0
    _
  %s9 = ssub.s32 1, %s7
  %s10 = scalar_select 0, %s9, %s7
  loop: start=0, step=1, limit=4
  $region2: #{block_forward.4} parent=0 // loop_pre_header
    _
  $region3: #{block_forward.4} parent=0 // loop_header
    %s12 = sphi 0, %s16
    %p13 = scmp.ge.s32.totalorder %s12, 4
    %s22 = sphi 0, %s24
    %s25 = sphi 0, %s22
    %s26 = sphi 0, %s25
    %s42 = sphi 0, %s26
    %s46 = sphi 0, %s46
    %s48 = sphi 0, %s46
    %s49 = sphi 0, %s48
    %s63 = sphi 0, %s49
    %s67 = sphi 0, %s67
    %s69 = sphi 0, %s67
    %s70 = sphi 0, %s69
    %s84 = sphi 0, %s70
    %s88 = sphi 0, %s88
    %s90 = sphi 0, %s88
    %s91 = sphi 0, %s90
    %s105 = sphi 0, %s91
    %s111 = sphi 0, %s113
    %s114 = sphi 0, %s111
    %s115 = sphi 0, %s114
    %s131 = sphi 0, %s115
    %s137 = sphi 0, %s139
    %s140 = sphi 0, %s137
    %s141 = sphi 0, %s140
    %s157 = sphi 0, %s141
  $region4: #{block_forward.4} parent=0 // loop_header_branch
    %15 = sbr.rel (%p13) target = $region8
  $region5: #{block_forward.4} parent=0 // loop_body
    %s17 = ssub.s32 %s12, 1
    %s18 = ssub.s32 %s12, 2
    %s19 = sadd.s32 %s12, 1
    %s20 = ssub.s32 %s12, %s19
    %p21 = scmp.eq.s32.totalorder %s20, 0
    %s23 = sadd.s32 %s22, 1
    %s24 = scalar_select %p21, %s22, %s23
    %p27 = pneg %p21
    %p28 = scmp.eq.s32.totalorder %s12, 1
    %p29 = por %p27, %p28
    %p30 = scmp.ne.s32.totalorder %s22, %s25
    %p31 = scmp.eq.s32.totalorder %s12, 0
    %p32 = por %p30, %p31
    %p33 = scmp.ne.s32.totalorder %s22, %s25
    %p34 = scmp.eq.s32.totalorder %s17, 1
    %p35 = por %p33, %p34
    %p36 = scmp.ne.s32.totalorder %s25, %s26
    %p37 = scmp.eq.s32.totalorder %s17, 0
    %p38 = por %p36, %p37
    %p39 = scmp.ne.s32.totalorder %s25, %s26
    %p40 = scmp.eq.s32.totalorder %s18, 1
    %p41 = por %p39, %p40
    %p43 = scmp.ne.s32.totalorder %s26, %s42
    %p44 = scmp.eq.s32.totalorder %s18, 0
    %p45 = por %p43, %p44
    %s47 = sadd.s32 %s46, 1
    %p50 = scmp.eq.s32.totalorder %s12, 1
    %p51 = scmp.ne.s32.totalorder %s46, %s48
    %p52 = scmp.eq.s32.totalorder %s12, 0
    %p53 = por %p51, %p52
    %p54 = scmp.ne.s32.totalorder %s46, %s48
    %p55 = scmp.eq.s32.totalorder %s17, 1
    %p56 = por %p54, %p55
    %p57 = scmp.ne.s32.totalorder %s48, %s49
    %p58 = scmp.eq.s32.totalorder %s17, 0
    %p59 = por %p57, %p58
    %p60 = scmp.ne.s32.totalorder %s48, %s49
    %p61 = scmp.eq.s32.totalorder %s18, 1
    %p62 = por %p60, %p61
    %p64 = scmp.ne.s32.totalorder %s49, %s63
    %p65 = scmp.eq.s32.totalorder %s18, 0
    %p66 = por %p64, %p65
    %s68 = sadd.s32 %s67, 1
    %p71 = scmp.eq.s32.totalorder %s12, 1
    %p72 = scmp.ne.s32.totalorder %s67, %s69
    %p73 = scmp.eq.s32.totalorder %s12, 0
    %p74 = por %p72, %p73
    %p75 = scmp.ne.s32.totalorder %s67, %s69
    %p76 = scmp.eq.s32.totalorder %s17, 1
    %p77 = por %p75, %p76
    %p78 = scmp.ne.s32.totalorder %s69, %s70
    %p79 = scmp.eq.s32.totalorder %s17, 0
    %p80 = por %p78, %p79
    %p81 = scmp.ne.s32.totalorder %s69, %s70
    %p82 = scmp.eq.s32.totalorder %s18, 1
    %p83 = por %p81, %p82
    %p85 = scmp.ne.s32.totalorder %s70, %s84
    %p86 = scmp.eq.s32.totalorder %s18, 0
    %p87 = por %p85, %p86
    %s89 = sadd.s32 %s88, 1
    %p92 = scmp.eq.s32.totalorder %s12, 1
    %p93 = scmp.ne.s32.totalorder %s88, %s90
    %p94 = scmp.eq.s32.totalorder %s12, 0
    %p95 = por %p93, %p94
    %p96 = scmp.ne.s32.totalorder %s88, %s90
    %p97 = scmp.eq.s32.totalorder %s17, 1
    %p98 = por %p96, %p97
    %p99 = scmp.ne.s32.totalorder %s90, %s91
    %p100 = scmp.eq.s32.totalorder %s17, 0
    %p101 = por %p99, %p100
    %p102 = scmp.ne.s32.totalorder %s90, %s91
    %p103 = scmp.eq.s32.totalorder %s18, 1
    %p104 = por %p102, %p103
    %p106 = scmp.ne.s32.totalorder %s91, %s105
    %p107 = scmp.eq.s32.totalorder %s18, 0
    %p108 = por %p106, %p107
    %s109 = ssub.s32 %s12, %s19
    %p110 = scmp.eq.s32.totalorder %s109, 0
    %s112 = sadd.s32 %s111, 1
    %s113 = scalar_select %p110, %s111, %s112
    %p116 = pneg %p110
    %p117 = scmp.eq.s32.totalorder %s12, 1
    %p118 = por %p116, %p117
    %p119 = scmp.ne.s32.totalorder %s111, %s114
    %p120 = scmp.eq.s32.totalorder %s12, 0
    %p121 = por %p119, %p120
    %p122 = scmp.ne.s32.totalorder %s111, %s114
    %p123 = scmp.eq.s32.totalorder %s17, 1
    %p124 = por %p122, %p123
    %p125 = scmp.ne.s32.totalorder %s114, %s115
    %p126 = scmp.eq.s32.totalorder %s17, 0
    %p127 = por %p125, %p126
    %p128 = scmp.ne.s32.totalorder %s114, %s115
    %p129 = scmp.eq.s32.totalorder %s18, 1
    %p130 = por %p128, %p129
    %p132 = scmp.ne.s32.totalorder %s115, %s131
    %p133 = scmp.eq.s32.totalorder %s18, 0
    %p134 = por %p132, %p133
    %s135 = ssub.s32 %s12, %s19
    %p136 = scmp.eq.s32.totalorder %s135, 0
    %s138 = sadd.s32 %s137, 1
    %s139 = scalar_select %p136, %s137, %s138
    %p142 = pneg %p136
    %p143 = scmp.eq.s32.totalorder %s12, 1
    %p144 = por %p142, %p143
    %p145 = scmp.ne.s32.totalorder %s137, %s140
    %p146 = scmp.eq.s32.totalorder %s12, 0
    %p147 = por %p145, %p146
    %p148 = scmp.ne.s32.totalorder %s137, %s140
    %p149 = scmp.eq.s32.totalorder %s17, 1
    %p150 = por %p148, %p149
    %p151 = scmp.ne.s32.totalorder %s140, %s141
    %p152 = scmp.eq.s32.totalorder %s17, 0
    %p153 = por %p151, %p152
    %p154 = scmp.ne.s32.totalorder %s140, %s141
    %p155 = scmp.eq.s32.totalorder %s18, 1
    %p156 = por %p154, %p155
    %p158 = scmp.ne.s32.totalorder %s141, %s157
    %p159 = scmp.eq.s32.totalorder %s18, 0
    %p160 = por %p158, %p159
    %p161 = scmp.le.s32.totalorder 1, %s12
    %p162 = scmp.lt.s32.totalorder %s12, 3
    %p163 = pnand %p161, %p162
    %p164 = pneg %p163
    // Predicated region
    $region9: #{block_forward.4} parent=5 // pred_check
      _
    $region10: #{block_forward.4} parent=5 // pred_check_branch
      %166 = sbr.rel (%p163) target = $region12
    $region11: #{block_forward.4} parent=5 // pred_region
      %s167 = ssub.s32 %s12, 1
      // Predicated region
      $region13: #{block_forward.4} parent=11 // pred_check
        %p168 = pneg %p59
      $region14: #{block_forward.4} parent=11 // pred_check_branch
        %170 = sbr.rel (%p168) target = $region16
      $region15: #{block_forward.4} parent=11 // pred_region
        _
      $region16: #{block_forward.4} parent=11 // pred_fallthru
        _
      // Predicated region
      $region17: #{block_forward.4} parent=11 // pred_check
        %p171 = pneg %p80
      $region18: #{block_forward.4} parent=11 // pred_check_branch
        %173 = sbr.rel (%p171) target = $region20
      $region19: #{block_forward.4} parent=11 // pred_region
        _
      $region20: #{block_forward.4} parent=11 // pred_fallthru
        _
      // Predicated region
      $region21: #{block_forward.4} parent=11 // pred_check
        %p174 = pneg %p101
      $region22: #{block_forward.4} parent=11 // pred_check_branch
        %176 = sbr.rel (%p174) target = $region24
      $region23: #{block_forward.4} parent=11 // pred_region
        _
      $region24: #{block_forward.4} parent=11 // pred_fallthru
        _
    $region12: #{block_forward.4} parent=5 // pred_fallthru
      _
    %p177 = scmp.lt.s32.totalorder %s12, 2
    // Predicated region
    $region25: #{block_forward.4} parent=5 // pred_check
      %p178 = pneg %p177
    $region26: #{block_forward.4} parent=5 // pred_check_branch
      %180 = sbr.rel (%p178) target = $region28
    $region27: #{block_forward.4} parent=5 // pred_region
      // Predicated region
      $region29: #{block_forward.4} parent=27 // pred_check
        %p181 = pneg %p32
      $region30: #{block_forward.4} parent=27 // pred_check_branch
        %183 = sbr.rel (%p181) target = $region32
      $region31: #{block_forward.4} parent=27 // pred_region
        %p184 = scmp.lt.s32.totalorder %s12, 1
        %s185 = scalar_select %p184, %s12, 1
        %s186 = smul.addr %s185, 2
        %s187 = smul.addr %s186, 8
        %s188 = scalar_lea.vmem %s0, %s187
      $region32: #{block_forward.4} parent=27 // pred_fallthru
        _
    $region28: #{block_forward.4} parent=5 // pred_fallthru
      _
    %p189 = scmp.le.s32.totalorder 1, %s12
    %p190 = scmp.lt.s32.totalorder %s12, 3
    %p191 = pnand %p189, %p190
    %p192 = pneg %p191
    // Predicated region
    $region33: #{block_forward.4} parent=5 // pred_check
      _
    $region34: #{block_forward.4} parent=5 // pred_check_branch
      %194 = sbr.rel (%p191) target = $region36
    $region35: #{block_forward.4} parent=5 // pred_region
      %s195 = ssub.s32 %s12, 1
      %p196 = scmp.lt.s32.totalorder %s17, 1
      %s197 = scalar_select %p196, %s17, 1
      %s198 = smul.addr %s197, 2
      %s199 = smul.addr %s198, 8
      %s200 = scalar_lea.vmem %s0, %s199
      %p201 = pneg %p38
      %p202 = pneg %p35
      %p203 = pneg %p59
      %p204 = pneg %p56
      %p205 = pneg %p80
      %p206 = pneg %p77
      %p207 = pneg %p101
      %p208 = pneg %p98
      %p209 = pneg %p127
      %p210 = pneg %p124
      %p211 = scmp.lt.s32.totalorder %s17, 1
      %s212 = scalar_select %p211, %s17, 1
      %s213 = smul.addr %s212, 2
      %s214 = smul.addr %s213, 8
      %s215 = scalar_lea.vmem %s4, %s214
      %p216 = pneg %p153
      %p217 = pneg %p150
      %p218 = scmp.lt.s32.totalorder %s17, 1
      %s219 = scalar_select %p218, %s17, 1
      %s220 = smul.addr %s219, 2
      %s221 = scalar_lea.vmem %s5, %s220
      %p222 = scmp.lt.s32.totalorder %s17, 1
      %s223 = scalar_select %p222, %s17, 1
      %s224 = smul.addr %s223, 2
      %s225 = smul.addr %s224, 8
      %s226 = scalar_lea.vmem %s0, %s225
      %p227 = scmp.lt.s32.totalorder %s17, 1
      %s228 = scalar_select %p227, %s17, 1
      %s229 = smul.addr %s228, 2
      %s230 = smul.addr %s229, 8
      %s231 = scalar_lea.vmem %s4, %s230
      %p232 = scmp.lt.s32.totalorder %s17, 1
      %s233 = scalar_select %p232, %s17, 1
      %s234 = smul.addr %s233, 2
      %s235 = scalar_lea.vmem %s5, %s234
      %v236 = vld [vmem:[%s226] sm:$0xff]
      %v237 = vld [vmem:[%s226 + $0x8] sm:$0xff]
      %v238 = vld [vmem:[%s1] sm:$0x1]
      %v240 = vlaneseq
      %v241 = vshrl.u32 %v240, 7
      %v242 = vsub.s32 0, %v241
      %v243 = vrot.slane %v238, %v242
      %v245 = vmul.f32 %v236, %v243
      %v246 = vmul.f32 %v237, %v243
      %v247 = vld [vmem:[%s2] sm:$0x1]
      %v249 = vlaneseq
      %v250 = vshrl.u32 %v249, 7
      %v251 = vsub.s32 0, %v250
      %v252 = vrot.slane %v247, %v251
      %v254 = vadd.f32 %v245, %v252
      %v255 = vadd.f32 %v246, %v252
      %v256 = vmax.f32 %v254, 0.0
      %v257 = vmax.f32 %v255, 0.0
      %v258 = vld [vmem:[%s3] sm:$0xff]
      %v259 = vld [vmem:[%s3 + $0x8] sm:$0xff]
      %v260 = vld [vmem:[%s3 + $0x10] sm:$0xff]
      %v261 = vld [vmem:[%s3 + $0x18] sm:$0xff]
      %v262 = vld [vmem:[%s3 + $0x20] sm:$0xff]
      %v263 = vld [vmem:[%s3 + $0x28] sm:$0xff]
      %v264 = vld [vmem:[%s3 + $0x30] sm:$0xff]
      %v265 = vld [vmem:[%s3 + $0x38] sm:$0xff]
      %vm266 = vcmask 523264
      %v268 = vsel %vm266, %v256, 0
      %v271 = vsel %vm266, %v257, 0
      %273 = vmatprep.subr.mxu0 0.0
      %274 = vmatpush1.msra.mxu0 %v258
      %275 = vmatprep.subr.mxu0 0.0
      %276 = vmatpush1.msra.mxu0 %v259
      %277 = vmatprep.subr.mxu0 0.0
      %278 = vmatpush1.msra.mxu0 %v260
      %279 = vmatprep.subr.mxu0 0.0
      %280 = vmatpush1.msra.mxu0 %v261
      %281 = vmatprep.subr.mxu0 0.0
      %282 = vmatpush1.msra.mxu0 %v262
      %283 = vmatprep.subr.mxu0 0.0
      %284 = vmatpush1.msra.mxu0 %v263
      %285 = vmatprep.subr.mxu0 0.0
      %286 = vmatpush1.msra.mxu0 %v264
      %287 = vmatprep.subr.mxu0 0.0
      %288 = vmatpush1.msra.mxu0 %v265
      %289 = vmatprep.subr.mxu0 0.0
      %290 = vmatpush1.msra.mxu0 0.0
      %291 = vmatprep.subr.mxu0 0.0
      %292 = vmatpush1.msra.mxu0 0.0
      %293 = vmatprep.subr.mxu0 0.0
      %294 = vmatpush1.msra.mxu0 0.0
      %295 = vmatprep.subr.mxu0 0.0
      %296 = vmatpush1.msra.mxu0 0.0
      %297 = vmatprep.subr.mxu0 0.0
      %298 = vmatpush1.msra.mxu0 0.0
      %299 = vmatprep.subr.mxu0 0.0
      %300 = vmatpush1.msra.mxu0 0.0
      %301 = vmatprep.subr.mxu0 0.0
      %302 = vmatpush1.msra.mxu0 0.0
      %303 = vmatprep.subr.mxu0 0.0
      %304 = vmatpush1.msra.mxu0 0.0
      %305 = vmatprep.subr.mxu0 0.0
      %306 = vmatpush1.msra.mxu0 0.0
      %307 = vmatprep.subr.mxu0 0.0
      %308 = vmatpush1.msra.mxu0 0.0
      %309 = vmatprep.subr.mxu0 0.0
      %310 = vmatpush1.msra.mxu0 0.0
      %311 = vmatprep.subr.mxu0 0.0
      %312 = vmatpush1.msra.mxu0 0.0
      %313 = vmatprep.subr.mxu0 0.0
      %314 = vmatpush1.msra.mxu0 0.0
      %315 = vmatprep.subr.mxu0 0.0
      %316 = vmatpush1.msra.mxu0 0.0
      %317 = vmatprep.subr.mxu0 0.0
      %318 = vmatpush1.msra.mxu0 0.0
      %319 = vmatprep.subr.mxu0 0.0
      %320 = vmatpush1.msra.mxu0 0.0
      %321 = vmatprep.subr.mxu0 0.0
      %322 = vmatpush1.msra.mxu0 0.0
      %323 = vmatprep.subr.mxu0 0.0
      %324 = vmatpush1.msra.mxu0 0.0
      %325 = vmatprep.subr.mxu0 0.0
      %326 = vmatpush1.msra.mxu0 0.0
      %327 = vmatprep.subr.mxu0 0.0
      %328 = vmatpush1.msra.mxu0 0.0
      %329 = vmatprep.subr.mxu0 0.0
      %330 = vmatpush1.msra.mxu0 0.0
      %331 = vmatprep.subr.mxu0 0.0
      %332 = vmatpush1.msra.mxu0 0.0
      %333 = vmatprep.subr.mxu0 0.0
      %334 = vmatpush1.msra.mxu0 0.0
      %335 = vmatprep.subr.mxu0 0.0
      %336 = vmatpush1.msra.mxu0 0.0
      %337 = vmatprep.mubr.f32.mxu0 0.0
      %338 = vmatmul.mubr.f32.gmra.mrb[0].mxu0 %v268
      %v339 = vpop.f32.mrb[0].mxu0
      %v340 = vadd.f32 0.0, %v339
      %v341 = vpop.f32.mrb[0].mxu0
      %342 = vmatprep.mubr.f32.mxu0 0.0
      %343 = vmatmul.mubr.f32.gmra.mrb[0].mxu0 %v271
      %v344 = vpop.f32.mrb[0].mxu0
      %v345 = vadd.f32 0.0, %v344
      %v346 = vpop.f32.mrb[0].mxu0
      %347 = vdwg.mxu0
      %s348 = scalar_lea.vmem %s3, 64
      %v349 = vld [vmem:[%s348] sm:$0xff]
      %v350 = vld [vmem:[%s348 + $0x8] sm:$0xff]
      %v351 = vld [vmem:[%s348 + $0x10] sm:$0xff]
      %v352 = vld [vmem:[%s348 + $0x18] sm:$0xff]
      %v353 = vld [vmem:[%s348 + $0x20] sm:$0xff]
      %v354 = vld [vmem:[%s348 + $0x28] sm:$0xff]
      %v355 = vld [vmem:[%s348 + $0x30] sm:$0xff]
      %v356 = vld [vmem:[%s348 + $0x38] sm:$0xff]
      %357 = vmatprep.subr.mxu0 0.0
      %358 = vmatpush1.msra.mxu0 %v349
      %359 = vmatprep.subr.mxu0 0.0
      %360 = vmatpush1.msra.mxu0 %v350
      %361 = vmatprep.subr.mxu0 0.0
      %362 = vmatpush1.msra.mxu0 %v351
      %363 = vmatprep.subr.mxu0 0.0
      %364 = vmatpush1.msra.mxu0 %v352
      %365 = vmatprep.subr.mxu0 0.0
      %366 = vmatpush1.msra.mxu0 %v353
      %367 = vmatprep.subr.mxu0 0.0
      %368 = vmatpush1.msra.mxu0 %v354
      %369 = vmatprep.subr.mxu0 0.0
      %370 = vmatpush1.msra.mxu0 %v355
      %371 = vmatprep.subr.mxu0 0.0
      %372 = vmatpush1.msra.mxu0 %v356
      %373 = vmatprep.subr.mxu0 0.0
      %374 = vmatpush1.msra.mxu0 0.0
      %375 = vmatprep.subr.mxu0 0.0
      %376 = vmatpush1.msra.mxu0 0.0
      %377 = vmatprep.subr.mxu0 0.0
      %378 = vmatpush1.msra.mxu0 0.0
      %379 = vmatprep.subr.mxu0 0.0
      %380 = vmatpush1.msra.mxu0 0.0
      %381 = vmatprep.subr.mxu0 0.0
      %382 = vmatpush1.msra.mxu0 0.0
      %383 = vmatprep.subr.mxu0 0.0
      %384 = vmatpush1.msra.mxu0 0.0
      %385 = vmatprep.subr.mxu0 0.0
      %386 = vmatpush1.msra.mxu0 0.0
      %387 = vmatprep.subr.mxu0 0.0
      %388 = vmatpush1.msra.mxu0 0.0
      %389 = vmatprep.subr.mxu0 0.0
      %390 = vmatpush1.msra.mxu0 0.0
      %391 = vmatprep.subr.mxu0 0.0
      %392 = vmatpush1.msra.mxu0 0.0
      %393 = vmatprep.subr.mxu0 0.0
      %394 = vmatpush1.msra.mxu0 0.0
      %395 = vmatprep.subr.mxu0 0.0
      %396 = vmatpush1.msra.mxu0 0.0
      %397 = vmatprep.subr.mxu0 0.0
      %398 = vmatpush1.msra.mxu0 0.0
      %399 = vmatprep.subr.mxu0 0.0
      %400 = vmatpush1.msra.mxu0 0.0
      %401 = vmatprep.subr.mxu0 0.0
      %402 = vmatpush1.msra.mxu0 0.0
      %403 = vmatprep.subr.mxu0 0.0
      %404 = vmatpush1.msra.mxu0 0.0
      %405 = vmatprep.subr.mxu0 0.0
      %406 = vmatpush1.msra.mxu0 0.0
      %407 = vmatprep.subr.mxu0 0.0
      %408 = vmatpush1.msra.mxu0 0.0
      %409 = vmatprep.subr.mxu0 0.0
      %410 = vmatpush1.msra.mxu0 0.0
      %411 = vmatprep.subr.mxu0 0.0
      %412 = vmatpush1.msra.mxu0 0.0
      %413 = vmatprep.subr.mxu0 0.0
      %414 = vmatpush1.msra.mxu0 0.0
      %415 = vmatprep.subr.mxu0 0.0
      %416 = vmatpush1.msra.mxu0 0.0
      %417 = vmatprep.subr.mxu0 0.0
      %418 = vmatpush1.msra.mxu0 0.0
      %419 = vmatprep.subr.mxu0 0.0
      %420 = vmatpush1.msra.mxu0 0.0
      %421 = vmatprep.mubr.f32.mxu0 0.0
      %422 = vmatmul.mubr.f32.gmra.mrb[0].mxu0 %v268
      %v423 = vpop.f32.mrb[0].mxu0
      %v424 = vadd.f32 0.0, %v423
      %v425 = vpop.f32.mrb[0].mxu0
      %426 = vmatprep.mubr.f32.mxu0 0.0
      %427 = vmatmul.mubr.f32.gmra.mrb[0].mxu0 %v271
      %v428 = vpop.f32.mrb[0].mxu0
      %v429 = vadd.f32 0.0, %v428
      %v430 = vpop.f32.mrb[0].mxu0
      %431 = vdwg.mxu0
      %s432 = scalar_lea.vmem %s3, 128
      %v433 = vld [vmem:[%s432] sm:$0xff]
      %v434 = vld [vmem:[%s432 + $0x8] sm:$0xff]
      %v435 = vld [vmem:[%s432 + $0x10] sm:$0xff]
      %v436 = vld [vmem:[%s432 + $0x18] sm:$0xff]
      %v437 = vld [vmem:[%s432 + $0x20] sm:$0xff]
      %v438 = vld [vmem:[%s432 + $0x28] sm:$0xff]
      %v439 = vld [vmem:[%s432 + $0x30] sm:$0xff]
      %v440 = vld [vmem:[%s432 + $0x38] sm:$0xff]
      %441 = vmatprep.subr.mxu0 0.0
      %442 = vmatpush1.msra.mxu0 %v433
      %443 = vmatprep.subr.mxu0 0.0
      %444 = vmatpush1.msra.mxu0 %v434
      %445 = vmatprep.subr.mxu0 0.0
      %446 = vmatpush1.msra.mxu0 %v435
      %447 = vmatprep.subr.mxu0 0.0
      %448 = vmatpush1.msra.mxu0 %v436
      %449 = vmatprep.subr.mxu0 0.0
      %450 = vmatpush1.msra.mxu0 %v437
      %451 = vmatprep.subr.mxu0 0.0
      %452 = vmatpush1.msra.mxu0 %v438
      %453 = vmatprep.subr.mxu0 0.0
      %454 = vmatpush1.msra.mxu0 %v439
      %455 = vmatprep.subr.mxu0 0.0
      %456 = vmatpush1.msra.mxu0 %v440
      %457 = vmatprep.subr.mxu0 0.0
      %458 = vmatpush1.msra.mxu0 0.0
      %459 = vmatprep.subr.mxu0 0.0
      %460 = vmatpush1.msra.mxu0 0.0
      %461 = vmatprep.subr.mxu0 0.0
      %462 = vmatpush1.msra.mxu0 0.0
      %463 = vmatprep.subr.mxu0 0.0
      %464 = vmatpush1.msra.mxu0 0.0
      %465 = vmatprep.subr.mxu0 0.0
      %466 = vmatpush1.msra.mxu0 0.0
      %467 = vmatprep.subr.mxu0 0.0
      %468 = vmatpush1.msra.mxu0 0.0
      %469 = vmatprep.subr.mxu0 0.0
      %470 = vmatpush1.msra.mxu0 0.0
      %471 = vmatprep.subr.mxu0 0.0
      %472 = vmatpush1.msra.mxu0 0.0
      %473 = vmatprep.subr.mxu0 0.0
      %474 = vmatpush1.msra.mxu0 0.0
      %475 = vmatprep.subr.mxu0 0.0
      %476 = vmatpush1.msra.mxu0 0.0
      %477 = vmatprep.subr.mxu0 0.0
      %478 = vmatpush1.msra.mxu0 0.0
      %479 = vmatprep.subr.mxu0 0.0
      %480 = vmatpush1.msra.mxu0 0.0
      %481 = vmatprep.subr.mxu0 0.0
      %482 = vmatpush1.msra.mxu0 0.0
      %483 = vmatprep.subr.mxu0 0.0
      %484 = vmatpush1.msra.mxu0 0.0
      %485 = vmatprep.subr.mxu0 0.0
      %486 = vmatpush1.msra.mxu0 0.0
      %487 = vmatprep.subr.mxu0 0.0
      %488 = vmatpush1.msra.mxu0 0.0
      %489 = vmatprep.subr.mxu0 0.0
      %490 = vmatpush1.msra.mxu0 0.0
      %491 = vmatprep.subr.mxu0 0.0
      %492 = vmatpush1.msra.mxu0 0.0
      %493 = vmatprep.subr.mxu0 0.0
      %494 = vmatpush1.msra.mxu0 0.0
      %495 = vmatprep.subr.mxu0 0.0
      %496 = vmatpush1.msra.mxu0 0.0
      %497 = vmatprep.subr.mxu0 0.0
      %498 = vmatpush1.msra.mxu0 0.0
      %499 = vmatprep.subr.mxu0 0.0
      %500 = vmatpush1.msra.mxu0 0.0
      %501 = vmatprep.subr.mxu0 0.0
      %502 = vmatpush1.msra.mxu0 0.0
      %503 = vmatprep.subr.mxu0 0.0
      %504 = vmatpush1.msra.mxu0 0.0
      %505 = vmatprep.mubr.f32.mxu0 0.0
      %506 = vmatmul.mubr.f32.gmra.mrb[0].mxu0 %v268
      %v507 = vpop.f32.mrb[0].mxu0
      %v508 = vadd.f32 0.0, %v507
      %v509 = vpop.f32.mrb[0].mxu0
      %510 = vmatprep.mubr.f32.mxu0 0.0
      %511 = vmatmul.mubr.f32.gmra.mrb[0].mxu0 %v271
      %v512 = vpop.f32.mrb[0].mxu0
      %v513 = vadd.f32 0.0, %v512
      %v514 = vpop.f32.mrb[0].mxu0
      %515 = vdwg.mxu0
      %vm518 = vcmask 1040384
      %v519 = vrot.slane %v340, 7
      %v520 = vrot.slane %v345, 7
      %v521 = vsel %vm518, %v519, %v520
      %v524 = vsel %vm518, 0.0, %v519
      %v525 = vadd.f32 %v424, %v524
      %v526 = vadd.f32 %v429, %v521
      %vm529 = vcmask 1046528
      %v530 = vrot.slane %v508, 1
      %v531 = vrot.slane %v513, 1
      %v532 = vsel %vm529, %v530, %v531
      %v535 = vsel %vm529, %v531, 0.0
      %v536 = vadd.f32 %v525, %v532
      %v537 = vadd.f32 %v526, %v535
      %538 = vst.msk [vmem:[%s231] sm:$0xff] %vm266, %v536
      %539 = vst.msk [vmem:[%s231 + $0x8] sm:$0xff] %vm266, %v537
      %v540 = vsel %vm266, %v536, 0.0
      %v541 = vsel %vm266, %v537, 0.0
      %v542 = vadd.f32 %v540, %v541
      %v543 = vrot.slane %v542, 4
      %v544 = vadd.f32 %v542, %v543
      %v545 = vrot.slane %v544, 2
      %v546 = vadd.f32 %v544, %v545
      %v547 = vrot.slane %v546, 1
      %v548 = vadd.f32 %v546, %v547
      %vm549 = vcmask 516096
      %550 = vst.msk [vmem:[%s235] sm:$0x1] %vm549, %v548
      %v551 = vmul.f32 %v536, %v536
      %v552 = vmul.f32 %v537, %v537
      %v553 = vsel %vm266, %v551, 0.0
      %v554 = vsel %vm266, %v552, 0.0
      %v555 = vadd.f32 %v553, %v554
      %v556 = vrot.slane %v555, 4
      %v557 = vadd.f32 %v555, %v556
      %v558 = vrot.slane %v557, 2
      %v559 = vadd.f32 %v557, %v558
      %v560 = vrot.slane %v559, 1
      %v561 = vadd.f32 %v559, %v560
      %562 = vst.msk [vmem:[%s235 + $0x1] sm:$0x1] %vm549, %v561
      %p563 = scmp.lt.s32.totalorder %s17, 1
      %s564 = scalar_select %p563, %s17, 1
      %s565 = smul.addr %s564, 2
      %s566 = smul.addr %s565, 8
      %s567 = scalar_lea.vmem %s4, %s566
      %p568 = scmp.lt.s32.totalorder %s17, 1
      %s569 = scalar_select %p568, %s17, 1
      %s570 = smul.addr %s569, 2
      %s571 = scalar_lea.vmem %s5, %s570
      // Predicated region
      $region37: #{block_forward.4} parent=35 // pred_check
        %p572 = pneg %p124
      $region38: #{block_forward.4} parent=35 // pred_check_branch
        %574 = sbr.rel (%p572) target = $region40
      $region39: #{block_forward.4} parent=35 // pred_region
        _
      $region40: #{block_forward.4} parent=35 // pred_fallthru
        _
      // Predicated region
      $region41: #{block_forward.4} parent=35 // pred_check
        %p575 = pneg %p150
      $region42: #{block_forward.4} parent=35 // pred_check_branch
        %577 = sbr.rel (%p575) target = $region44
      $region43: #{block_forward.4} parent=35 // pred_region
        _
      $region44: #{block_forward.4} parent=35 // pred_fallthru
        _
    $region36: #{block_forward.4} parent=5 // pred_fallthru
      _
    %p578 = scmp.le.s32.totalorder 2, %s12
    // Predicated region
    $region45: #{block_forward.4} parent=5 // pred_check
      %p579 = pneg %p578
    $region46: #{block_forward.4} parent=5 // pred_check_branch
      %581 = sbr.rel (%p579) target = $region48
    $region47: #{block_forward.4} parent=5 // pred_region
      %s582 = ssub.s32 %s12, 2
      // Predicated region
      $region49: #{block_forward.4} parent=47 // pred_check
        %p583 = pneg %p130
      $region50: #{block_forward.4} parent=47 // pred_check_branch
        %585 = sbr.rel (%p583) target = $region52
      $region51: #{block_forward.4} parent=47 // pred_region
        %p586 = scmp.lt.s32.totalorder %s18, 1
        %s587 = scalar_select %p586, %s18, 1
        %s588 = smul.addr %s587, 2
        %s589 = smul.addr %s588, 8
        %s590 = scalar_lea.vmem %s4, %s589
      $region52: #{block_forward.4} parent=47 // pred_fallthru
        _
      // Predicated region
      $region53: #{block_forward.4} parent=47 // pred_check
        %p591 = pneg %p156
      $region54: #{block_forward.4} parent=47 // pred_check_branch
        %593 = sbr.rel (%p591) target = $region56
      $region55: #{block_forward.4} parent=47 // pred_region
        %p594 = scmp.lt.s32.totalorder %s18, 1
        %s595 = scalar_select %p594, %s18, 1
        %s596 = smul.addr %s595, 2
        %s597 = scalar_lea.vmem %s5, %s596
      $region56: #{block_forward.4} parent=47 // pred_fallthru
        _
    $region48: #{block_forward.4} parent=5 // pred_fallthru
      _
  $region6: #{block_forward.4} parent=0 // loop_footer
    %s16 = sadd.s32 1, %s12
  $region7: #{block_forward.4} parent=0 // loop_footer_branch
    %11 = sbr.rel target = $region3
  $region8: #{block_forward.4} parent=0 // loop_exit
    _

// kernel: block_forward.5
$region0: #{block_forward.5}
  #allocation0 [shape = 'u32[]', space=smem, size = 0x4, offset = 0x4, fixed_abs, tag = 'smem constant byte address 0x4 - core index']
  #allocation1 [shape = 'u32[144,128]{1,0:T(1,128)}', space=vmem, size = 0x12000, scoped, tag = 'internal scratch']
  %s0 = inlined_call_operand.vmem [shape: f32[2,16,64], index: 0, kind: input, shape index: {}]
  %s1 = inlined_call_operand.vmem [shape: f32[1,64], index: 1, kind: input, shape index: {}]
  %s2 = inlined_call_operand.vmem [shape: f32[1,64], index: 2, kind: input, shape index: {}]
  %s3 = inlined_call_operand.vmem [shape: f32[2,16,64], index: 3, kind: input, shape index: {}]
  %s4 = inlined_call_operand.vmem [shape: f32[2,16,64], index: 4, kind: output, shape index: {}]
  %s5 = sld [smem:[#allocation0]]
  $region49: #{block_forward.5} parent=0
    _
  %s7 = ssub.s32 1, %s5
  %s8 = scalar_select 0, %s7, %s5
  loop: start=0, step=1, limit=4
  $region2: #{block_forward.5} parent=0 // loop_pre_header
    _
  $region3: #{block_forward.5} parent=0 // loop_header
    %s10 = sphi 0, %s14
    %p11 = scmp.ge.s32.totalorder %s10, 4
    %s20 = sphi 0, %s22
    %s23 = sphi 0, %s20
    %s24 = sphi 0, %s23
    %s40 = sphi 0, %s24
    %s44 = sphi 0, %s44
    %s46 = sphi 0, %s44
    %s47 = sphi 0, %s46
    %s61 = sphi 0, %s47
    %s65 = sphi 0, %s65
    %s67 = sphi 0, %s65
    %s68 = sphi 0, %s67
    %s82 = sphi 0, %s68
    %s88 = sphi 0, %s90
    %s91 = sphi 0, %s88
    %s92 = sphi 0, %s91
    %s108 = sphi 0, %s92
    %s114 = sphi 0, %s116
    %s117 = sphi 0, %s114
    %s118 = sphi 0, %s117
    %s134 = sphi 0, %s118
  $region4: #{block_forward.5} parent=0 // loop_header_branch
    %13 = sbr.rel (%p11) target = $region8
  $region5: #{block_forward.5} parent=0 // loop_body
    %s15 = ssub.s32 %s10, 1
    %s16 = ssub.s32 %s10, 2
    %s17 = sadd.s32 %s10, 1
    %s18 = ssub.s32 %s10, %s17
    %p19 = scmp.eq.s32.totalorder %s18, 0
    %s21 = sadd.s32 %s20, 1
    %s22 = scalar_select %p19, %s20, %s21
    %p25 = pneg %p19
    %p26 = scmp.eq.s32.totalorder %s10, 1
    %p27 = por %p25, %p26
    %p28 = scmp.ne.s32.totalorder %s20, %s23
    %p29 = scmp.eq.s32.totalorder %s10, 0
    %p30 = por %p28, %p29
    %p31 = scmp.ne.s32.totalorder %s20, %s23
    %p32 = scmp.eq.s32.totalorder %s15, 1
    %p33 = por %p31, %p32
    %p34 = scmp.ne.s32.totalorder %s23, %s24
    %p35 = scmp.eq.s32.totalorder %s15, 0
    %p36 = por %p34, %p35
    %p37 = scmp.ne.s32.totalorder %s23, %s24
    %p38 = scmp.eq.s32.totalorder %s16, 1
    %p39 = por %p37, %p38
    %p41 = scmp.ne.s32.totalorder %s24, %s40
    %p42 = scmp.eq.s32.totalorder %s16, 0
    %p43 = por %p41, %p42
    %s45 = sadd.s32 %s44, 1
    %p48 = scmp.eq.s32.totalorder %s10, 1
    %p49 = scmp.ne.s32.totalorder %s44, %s46
    %p50 = scmp.eq.s32.totalorder %s10, 0
    %p51 = por %p49, %p50
    %p52 = scmp.ne.s32.totalorder %s44, %s46
    %p53 = scmp.eq.s32.totalorder %s15, 1
    %p54 = por %p52, %p53
    %p55 = scmp.ne.s32.totalorder %s46, %s47
    %p56 = scmp.eq.s32.totalorder %s15, 0
    %p57 = por %p55, %p56
    %p58 = scmp.ne.s32.totalorder %s46, %s47
    %p59 = scmp.eq.s32.totalorder %s16, 1
    %p60 = por %p58, %p59
    %p62 = scmp.ne.s32.totalorder %s47, %s61
    %p63 = scmp.eq.s32.totalorder %s16, 0
    %p64 = por %p62, %p63
    %s66 = sadd.s32 %s65, 1
    %p69 = scmp.eq.s32.totalorder %s10, 1
    %p70 = scmp.ne.s32.totalorder %s65, %s67
    %p71 = scmp.eq.s32.totalorder %s10, 0
    %p72 = por %p70, %p71
    %p73 = scmp.ne.s32.totalorder %s65, %s67
    %p74 = scmp.eq.s32.totalorder %s15, 1
    %p75 = por %p73, %p74
    %p76 = scmp.ne.s32.totalorder %s67, %s68
    %p77 = scmp.eq.s32.totalorder %s15, 0
    %p78 = por %p76, %p77
    %p79 = scmp.ne.s32.totalorder %s67, %s68
    %p80 = scmp.eq.s32.totalorder %s16, 1
    %p81 = por %p79, %p80
    %p83 = scmp.ne.s32.totalorder %s68, %s82
    %p84 = scmp.eq.s32.totalorder %s16, 0
    %p85 = por %p83, %p84
    %s86 = ssub.s32 %s10, %s17
    %p87 = scmp.eq.s32.totalorder %s86, 0
    %s89 = sadd.s32 %s88, 1
    %s90 = scalar_select %p87, %s88, %s89
    %p93 = pneg %p87
    %p94 = scmp.eq.s32.totalorder %s10, 1
    %p95 = por %p93, %p94
    %p96 = scmp.ne.s32.totalorder %s88, %s91
    %p97 = scmp.eq.s32.totalorder %s10, 0
    %p98 = por %p96, %p97
    %p99 = scmp.ne.s32.totalorder %s88, %s91
    %p100 = scmp.eq.s32.totalorder %s15, 1
    %p101 = por %p99, %p100
    %p102 = scmp.ne.s32.totalorder %s91, %s92
    %p103 = scmp.eq.s32.totalorder %s15, 0
    %p104 = por %p102, %p103
    %p105 = scmp.ne.s32.totalorder %s91, %s92
    %p106 = scmp.eq.s32.totalorder %s16, 1
    %p107 = por %p105, %p106
    %p109 = scmp.ne.s32.totalorder %s92, %s108
    %p110 = scmp.eq.s32.totalorder %s16, 0
    %p111 = por %p109, %p110
    %s112 = ssub.s32 %s10, %s17
    %p113 = scmp.eq.s32.totalorder %s112, 0
    %s115 = sadd.s32 %s114, 1
    %s116 = scalar_select %p113, %s114, %s115
    %p119 = pneg %p113
    %p120 = scmp.eq.s32.totalorder %s10, 1
    %p121 = por %p119, %p120
    %p122 = scmp.ne.s32.totalorder %s114, %s117
    %p123 = scmp.eq.s32.totalorder %s10, 0
    %p124 = por %p122, %p123
    %p125 = scmp.ne.s32.totalorder %s114, %s117
    %p126 = scmp.eq.s32.totalorder %s15, 1
    %p127 = por %p125, %p126
    %p128 = scmp.ne.s32.totalorder %s117, %s118
    %p129 = scmp.eq.s32.totalorder %s15, 0
    %p130 = por %p128, %p129
    %p131 = scmp.ne.s32.totalorder %s117, %s118
    %p132 = scmp.eq.s32.totalorder %s16, 1
    %p133 = por %p131, %p132
    %p135 = scmp.ne.s32.totalorder %s118, %s134
    %p136 = scmp.eq.s32.totalorder %s16, 0
    %p137 = por %p135, %p136
    %p138 = scmp.le.s32.totalorder 1, %s10
    %p139 = scmp.lt.s32.totalorder %s10, 3
    %p140 = pnand %p138, %p139
    %p141 = pneg %p140
    // Predicated region
    $region9: #{block_forward.5} parent=5 // pred_check
      _
    $region10: #{block_forward.5} parent=5 // pred_check_branch
      %143 = sbr.rel (%p140) target = $region12
    $region11: #{block_forward.5} parent=5 // pred_region
      %s144 = ssub.s32 %s10, 1
      // Predicated region
      $region13: #{block_forward.5} parent=11 // pred_check
        %p145 = pneg %p57
      $region14: #{block_forward.5} parent=11 // pred_check_branch
        %147 = sbr.rel (%p145) target = $region16
      $region15: #{block_forward.5} parent=11 // pred_region
        _
      $region16: #{block_forward.5} parent=11 // pred_fallthru
        _
      // Predicated region
      $region17: #{block_forward.5} parent=11 // pred_check
        %p148 = pneg %p78
      $region18: #{block_forward.5} parent=11 // pred_check_branch
        %150 = sbr.rel (%p148) target = $region20
      $region19: #{block_forward.5} parent=11 // pred_region
        _
      $region20: #{block_forward.5} parent=11 // pred_fallthru
        _
    $region12: #{block_forward.5} parent=5 // pred_fallthru
      _
    %p151 = scmp.lt.s32.totalorder %s10, 2
    // Predicated region
    $region21: #{block_forward.5} parent=5 // pred_check
      %p152 = pneg %p151
    $region22: #{block_forward.5} parent=5 // pred_check_branch
      %154 = sbr.rel (%p152) target = $region24
    $region23: #{block_forward.5} parent=5 // pred_region
      // Predicated region
      $region25: #{block_forward.5} parent=23 // pred_check
        %p155 = pneg %p30
      $region26: #{block_forward.5} parent=23 // pred_check_branch
        %157 = sbr.rel (%p155) target = $region28
      $region27: #{block_forward.5} parent=23 // pred_region
        %p158 = scmp.lt.s32.totalorder %s10, 1
        %s159 = scalar_select %p158, %s10, 1
        %s160 = smul.addr %s159, 2
        %s161 = smul.addr %s160, 8
        %s162 = scalar_lea.vmem %s0, %s161
      $region28: #{block_forward.5} parent=23 // pred_fallthru
        _
      // Predicated region
      $region29: #{block_forward.5} parent=23 // pred_check
        %p163 = pneg %p98
      $region30: #{block_forward.5} parent=23 // pred_check_branch
        %165 = sbr.rel (%p163) target = $region32
      $region31: #{block_forward.5} parent=23 // pred_region
        %p166 = scmp.lt.s32.totalorder %s10, 1
        %s167 = scalar_select %p166, %s10, 1
        %s168 = smul.addr %s167, 2
        %s169 = smul.addr %s168, 8
        %s170 = scalar_lea.vmem %s3, %s169
      $region32: #{block_forward.5} parent=23 // pred_fallthru
        _
    $region24: #{block_forward.5} parent=5 // pred_fallthru
      _
    %p171 = scmp.le.s32.totalorder 1, %s10
    %p172 = scmp.lt.s32.totalorder %s10, 3
    %p173 = pnand %p171, %p172
    %p174 = pneg %p173
    // Predicated region
    $region33: #{block_forward.5} parent=5 // pred_check
      _
    $region34: #{block_forward.5} parent=5 // pred_check_branch
      %176 = sbr.rel (%p173) target = $region36
    $region35: #{block_forward.5} parent=5 // pred_region
      %s177 = ssub.s32 %s10, 1
      %p178 = scmp.lt.s32.totalorder %s15, 1
      %s179 = scalar_select %p178, %s15, 1
      %s180 = smul.addr %s179, 2
      %s181 = smul.addr %s180, 8
      %s182 = scalar_lea.vmem %s0, %s181
      %p183 = pneg %p36
      %p184 = pneg %p33
      %p185 = pneg %p57
      %p186 = pneg %p54
      %p187 = pneg %p78
      %p188 = pneg %p75
      %p189 = scmp.lt.s32.totalorder %s15, 1
      %s190 = scalar_select %p189, %s15, 1
      %s191 = smul.addr %s190, 2
      %s192 = smul.addr %s191, 8
      %s193 = scalar_lea.vmem %s3, %s192
      %p194 = pneg %p104
      %p195 = pneg %p101
      %p196 = pneg %p130
      %p197 = pneg %p127
      %p198 = scmp.lt.s32.totalorder %s15, 1
      %s199 = scalar_select %p198, %s15, 1
      %s200 = smul.addr %s199, 2
      %s201 = smul.addr %s200, 8
      %s202 = scalar_lea.vmem %s4, %s201
      %p203 = scmp.lt.s32.totalorder %s15, 1
      %s204 = scalar_select %p203, %s15, 1
      %s205 = smul.addr %s204, 2
      %s206 = smul.addr %s205, 8
      %s207 = scalar_lea.vmem %s0, %s206
      %p208 = scmp.lt.s32.totalorder %s15, 1
      %s209 = scalar_select %p208, %s15, 1
      %s210 = smul.addr %s209, 2
      %s211 = smul.addr %s210, 8
      %s212 = scalar_lea.vmem %s3, %s211
      %p213 = scmp.lt.s32.totalorder %s15, 1
      %s214 = scalar_select %p213, %s15, 1
      %s215 = smul.addr %s214, 2
      %s216 = smul.addr %s215, 8
      %s217 = scalar_lea.vmem %s4, %s216
      %v218 = vld [vmem:[%s207] sm:$0xff]
      %v219 = vld [vmem:[%s207 + $0x8] sm:$0xff]
      %v220 = vld [vmem:[%s1] sm:$0x1]
      %v222 = vlaneseq
      %v223 = vshrl.u32 %v222, 7
      %v224 = vsub.s32 0, %v223
      %v225 = vrot.slane %v220, %v224
      %v227 = vmul.f32 %v218, %v225
      %v228 = vmul.f32 %v219, %v225
      %v229 = vld [vmem:[%s2] sm:$0x1]
      %v231 = vlaneseq
      %v232 = vshrl.u32 %v231, 7
      %v233 = vsub.s32 0, %v232
      %v234 = vrot.slane %v229, %v233
      %v236 = vadd.f32 %v227, %v234
      %v237 = vadd.f32 %v228, %v234
      %v238 = vld [vmem:[%s212] sm:$0xff]
      %v239 = vld [vmem:[%s212 + $0x8] sm:$0xff]
      %v240 = vadd.f32 %v236, %v238
      %v241 = vadd.f32 %v237, %v239
      %v242 = vmax.f32 %v240, 0.0
      %v243 = vmax.f32 %v241, 0.0
      %vm244 = vcmask 523264
      %245 = vst.msk [vmem:[%s217] sm:$0xff] %vm244, %v242
      %246 = vst.msk [vmem:[%s217 + $0x8] sm:$0xff] %vm244, %v243
      %p247 = scmp.lt.s32.totalorder %s15, 1
      %s248 = scalar_select %p247, %s15, 1
      %s249 = smul.addr %s248, 2
      %s250 = smul.addr %s249, 8
      %s251 = scalar_lea.vmem %s4, %s250
      // Predicated region
      $region37: #{block_forward.5} parent=35 // pred_check
        %p252 = pneg %p127
      $region38: #{block_forward.5} parent=35 // pred_check_branch
        %254 = sbr.rel (%p252) target = $region40
      $region39: #{block_forward.5} parent=35 // pred_region
        _
      $region40: #{block_forward.5} parent=35 // pred_fallthru
        _
    $region36: #{block_forward.5} parent=5 // pred_fallthru
      _
    %p255 = scmp.le.s32.totalorder 2, %s10
    // Predicated region
    $region41: #{block_forward.5} parent=5 // pred_check
      %p256 = pneg %p255
    $region42: #{block_forward.5} parent=5 // pred_check_branch
      %258 = sbr.rel (%p256) target = $region44
    $region43: #{block_forward.5} parent=5 // pred_region
      %s259 = ssub.s32 %s10, 2
      // Predicated region
      $region45: #{block_forward.5} parent=43 // pred_check
        %p260 = pneg %p133
      $region46: #{block_forward.5} parent=43 // pred_check_branch
        %262 = sbr.rel (%p260) target = $region48
      $region47: #{block_forward.5} parent=43 // pred_region
        %p263 = scmp.lt.s32.totalorder %s16, 1
        %s264 = scalar_select %p263, %s16, 1
        %s265 = smul.addr %s264, 2
        %s266 = smul.addr %s265, 8
        %s267 = scalar_lea.vmem %s4, %s266
      $region48: #{block_forward.5} parent=43 // pred_fallthru
        _
    $region44: #{block_forward.5} parent=5 // pred_fallthru
      _
  $region6: #{block_forward.5} parent=0 // loop_footer
    %s14 = sadd.s32 1, %s10
  $region7: #{block_forward.5} parent=0 // loop_footer_branch
    %9 = sbr.rel target = $region3
  $region8: #{block_forward.5} parent=0 // loop_exit
    _

</llo_original>
